<compile_context>
chip_gen: v7x
topology: tpu7x:2x2x1
jax: 0.10.0
libtpu: 0.0.40
codegen_flags: <defaults>
</compile_context>

<pallas_src>
import jax
import jax.numpy as jnp
import numpy as np
from jax import lax
from jax.experimental import pallas as pl
from jax.experimental.pallas import tpu as pltpu

LATENT_DIM = 7
N = 10              # spatial side (Unflatten -> (1, 10, 10))
F = N * N           # 100 flattened features
H = 32              # hidden width
L_PAD = 8           # latent dim padded 7 -> 8 (intermediate only)
MAX_TB = 2048       # max batch-tile rows per grid step
MIN_STEPS = 2       # aim for >=2 grid steps (keeps both v7x TensorCores busy)


def band_kernel(x_ref, w1_ref, b1_ref, w2_ref, b2_ref,
                w3_ref, b3_ref, w4_ref, b4_ref, o_ref):
    cdt = w1_ref.dtype                       # streaming / MXU-input dtype
    prec = (lax.Precision.HIGHEST if cdt == jnp.float32
            else lax.Precision.DEFAULT)
    x = x_ref[...].astype(cdt)                                        # (TB, 100)
    # encoder: Linear(100->32) + ReLU   (f32 accumulate, f32 bias+ReLU)
    h = jnp.maximum(jnp.dot(x, w1_ref[...], precision=prec,
                            preferred_element_type=jnp.float32) + b1_ref[...], 0.0)
    # encoder: Linear(32->7) + ReLU     (latent padded to 8; padding inert)
    z = jnp.maximum(jnp.dot(h.astype(cdt), w2_ref[...], precision=prec,
                            preferred_element_type=jnp.float32) + b2_ref[...], 0.0)
    # decoder: Linear(7->32) + ReLU
    d = jnp.maximum(jnp.dot(z.astype(cdt), w3_ref[...], precision=prec,
                            preferred_element_type=jnp.float32) + b3_ref[...], 0.0)
    # decoder: Linear(32->100) with both symmetrizations folded into W4/b4
    y = jnp.dot(d.astype(cdt), w4_ref[...], precision=prec,
                preferred_element_type=jnp.float32) + b4_ref[...]
    o_ref[...] = y.astype(o_ref.dtype)


def _sym_matrix_np():
    """S = 0.25*(I+P_T)(I+P_A) acting (on the right) on flat 10x10 row vectors."""
    idx = np.arange(F)
    i, j = idx // N, idx % N
    perm_t = j * N + i                        # transpose:      out[i,j] = z[j, i]
    perm_a = (N - 1 - j) * N + (N - 1 - i)    # anti-transpose: out[i,j] = z[N-1-j, N-1-i]
    eye = np.eye(F, dtype=np.float64)
    pt = eye[perm_t].T                        # (y @ pt)[k] = y[perm_t[k]]
    pa = eye[perm_a].T
    return 0.25 * (eye + pt) @ (eye + pa)     # transpose-sym applied first (matches module)


def init_params(key):
    """Deterministic init matching the PyTorch Linear shapes (stored as (in, out))."""
    def linear(k, fan_in, fan_out):
        kw, kb = jax.random.split(k)
        bound = 1.0 / np.sqrt(fan_in)
        w = jax.random.uniform(kw, (fan_in, fan_out), jnp.float32, -bound, bound)
        b = jax.random.uniform(kb, (1, fan_out), jnp.float32, -bound, bound)
        return w, b

    k1, k2, k3, k4 = jax.random.split(key, 4)
    w1, b1 = linear(k1, F, H)             # encoder Linear(100, 32)
    w2, b2 = linear(k2, H, LATENT_DIM)    # encoder Linear(32, 7)
    w3, b3 = linear(k3, LATENT_DIM, H)    # decoder Linear(7, 32)
    w4, b4 = linear(k4, H, F)             # decoder Linear(32, 100)
    return dict(w1=w1, b1=b1, w2=w2, b2=b2, w3=w3, b3=b3, w4=w4, b4=b4)


def prepare_kernel_params(params, dtype=jnp.float32):
    """One-time: fold symmetrization into W4/b4 (in float64), pad latent 7->8, cast.

    Weights are stored in `dtype` (f32 or bf16 streaming); biases stay f32 because
    they are added to the f32 MXU accumulators.
    """
    S = _sym_matrix_np()
    w4s = (np.asarray(params["w4"], np.float64) @ S).astype(np.float32)   # (32, 100)
    b4s = (np.asarray(params["b4"], np.float64) @ S).astype(np.float32)   # (1, 100)

    w2p = np.zeros((H, L_PAD), np.float32)
    w2p[:, :LATENT_DIM] = np.asarray(params["w2"], np.float32)
    b2p = np.zeros((1, L_PAD), np.float32)
    b2p[:, :LATENT_DIM] = np.asarray(params["b2"], np.float32)
    w3p = np.zeros((L_PAD, H), np.float32)
    w3p[:LATENT_DIM, :] = np.asarray(params["w3"], np.float32)

    return dict(
        w1=jnp.asarray(params["w1"], dtype), b1=jnp.asarray(params["b1"], jnp.float32),
        w2=jnp.asarray(w2p, dtype),          b2=jnp.asarray(b2p, jnp.float32),
        w3=jnp.asarray(w3p, dtype),          b3=jnp.asarray(params["b3"], jnp.float32),
        w4=jnp.asarray(w4s, dtype),          b4=jnp.asarray(b4s, jnp.float32),
    )


def _cdiv(a, b):
    return (a + b - 1) // b


def _round_up(a, m):
    return _cdiv(a, m) * m


@jax.jit
def band_generator_forward(x, kparams):
    """x: (B, 1, 10, 10) -> (B, 1, 10, 10) in the streaming dtype of kparams."""
    B = x.shape[0]
    x_flat = x.reshape(B, F)             # free reshape; natural layout, no padding
    cdt = kparams["w1"].dtype

    if B <= 8:
        tb = B                           # one block == full array dims (always legal)
    else:
        n_steps = max(MIN_STEPS, _cdiv(B, MAX_TB))     # >=2 steps for v7x dual-TC
        tb = _round_up(_cdiv(B, n_steps), 8)           # balanced tiles, multiple of 8
    n_tiles = _cdiv(B, tb)               # ragged tail => masked partial block

    row_spec = pl.BlockSpec((tb, F), lambda i: (i, 0))
    const = lambda shape: pl.BlockSpec(shape, lambda i: (0, 0))   # VMEM-resident weights

    out = pl.pallas_call(
        band_kernel,
        out_shape=jax.ShapeDtypeStruct((B, F), cdt),
        grid=(n_tiles,),
        in_specs=[row_spec,
                  const((F, H)), const((1, H)),
                  const((H, L_PAD)), const((1, L_PAD)),
                  const((L_PAD, H)), const((1, H)),
                  const((H, F)), const((1, F))],
        out_specs=row_spec,
        compiler_params=pltpu.CompilerParams(dimension_semantics=("parallel",)),
    )(x_flat, kparams["w1"], kparams["b1"], kparams["w2"], kparams["b2"],
      kparams["w3"], kparams["b3"], kparams["w4"], kparams["b4"])

    return out.reshape(B, 1, N, N)


def band_generator_reference(x, params):
    """Pure-JAX f32 reference mirroring the PyTorch forward exactly (no folding)."""
    hi = lax.Precision.HIGHEST
    B = x.shape[0]
    xf = x.reshape(B, F).astype(jnp.float32)
    h = jnp.maximum(jnp.dot(xf, params["w1"], precision=hi) + params["b1"], 0.0)
    z = jnp.maximum(jnp.dot(h, params["w2"], precision=hi) + params["b2"], 0.0)
    d = jnp.maximum(jnp.dot(z, params["w3"], precision=hi) + params["b3"], 0.0)
    y = (jnp.dot(d, params["w4"], precision=hi) + params["b4"]).reshape(B, 1, N, N)
    y = (y + jnp.swapaxes(y, 2, 3)) * 0.5
    rot = jnp.rot90(jnp.swapaxes(jnp.rot90(y, 1, (2, 3)), 2, 3), 3, (2, 3))
    y = (y + rot) * 0.5
    return y


if __name__ == "__main__":
    key = jax.random.PRNGKey(0)
    k_param, k_x1, k_x2 = jax.random.split(key, 3)

    params = init_params(k_param)

    # --- f32 path: strict agreement with the PyTorch-equivalent reference ---
    kparams32 = prepare_kernel_params(params, jnp.float32)

    x = jax.random.normal(k_x1, (2, 1, N, N), dtype=jnp.float32)    # module-sized input
    y = jax.block_until_ready(band_generator_forward(x, kparams32))
    y_ref = band_generator_reference(x, params)
    assert y.shape == (2, 1, N, N)
    assert jnp.allclose(y, y_ref, atol=1e-5, rtol=1e-5), "f32 mismatch vs reference"

    # multi-tile grid + ragged last tile (masked partial block) check
    xb = jax.random.normal(k_x2, (130, 1, N, N), dtype=jnp.float32)
    yb = jax.block_until_ready(band_generator_forward(xb, kparams32))
    assert jnp.allclose(yb, band_generator_reference(xb, params),
                        atol=1e-5, rtol=1e-5), "ragged-tile mismatch vs reference"

    # --- bf16 streaming path (v6e/v7x HBM-bandwidth lever): loose agreement ---
    kparams16 = prepare_kernel_params(params, jnp.bfloat16)
    y16 = jax.block_until_ready(band_generator_forward(x, kparams16))
    assert jnp.allclose(y16.astype(jnp.float32), y_ref, atol=5e-2, rtol=5e-2), \
        "bf16 mismatch vs reference"

    print("KERNEL_OK")
</pallas_src>

<mosaic_0001>
module attributes {stable_mosaic.version = 11 : i64} {
  func.func @band_kernel(%arg0: i32, %arg1: memref<2x100xf32, #tpu.memory_space<vmem>>, %arg2: memref<100x32xf32, #tpu.memory_space<vmem>>, %arg3: memref<1x32xf32, #tpu.memory_space<vmem>>, %arg4: memref<32x8xf32, #tpu.memory_space<vmem>>, %arg5: memref<1x8xf32, #tpu.memory_space<vmem>>, %arg6: memref<8x32xf32, #tpu.memory_space<vmem>>, %arg7: memref<1x32xf32, #tpu.memory_space<vmem>>, %arg8: memref<32x100xf32, #tpu.memory_space<vmem>>, %arg9: memref<1x100xf32, #tpu.memory_space<vmem>>, %arg10: memref<2x100xf32, #tpu.memory_space<vmem>>) attributes {dimension_semantics = [#tpu.dimension_semantics<parallel>], iteration_bounds = array<i64: 1>, scalar_prefetch = 0 : i64, scratch_operands = 0 : i64, tpu.core_type = #tpu.core_type<tc>, window_params = [{transform_indices = @transform_0, window_bounds = array<i64: 2, 100>}, {pipeline_mode = #tpu.pipeline_mode<synchronous>, transform_indices = @transform_1, window_bounds = array<i64: 100, 32>}, {pipeline_mode = #tpu.pipeline_mode<synchronous>, transform_indices = @transform_2, window_bounds = array<i64: 1, 32>}, {pipeline_mode = #tpu.pipeline_mode<synchronous>, transform_indices = @transform_3, window_bounds = array<i64: 32, 8>}, {pipeline_mode = #tpu.pipeline_mode<synchronous>, transform_indices = @transform_4, window_bounds = array<i64: 1, 8>}, {pipeline_mode = #tpu.pipeline_mode<synchronous>, transform_indices = @transform_5, window_bounds = array<i64: 8, 32>}, {pipeline_mode = #tpu.pipeline_mode<synchronous>, transform_indices = @transform_6, window_bounds = array<i64: 1, 32>}, {pipeline_mode = #tpu.pipeline_mode<synchronous>, transform_indices = @transform_7, window_bounds = array<i64: 32, 100>}, {pipeline_mode = #tpu.pipeline_mode<synchronous>, transform_indices = @transform_8, window_bounds = array<i64: 1, 100>}, {transform_indices = @transform_9, window_bounds = array<i64: 2, 100>}]} {
    %c0 = arith.constant 0 : index
    %c0_0 = arith.constant 0 : index
    %0 = vector.load %arg1[%c0, %c0_0] : memref<2x100xf32, #tpu.memory_space<vmem>>, vector<2x100xf32>
    %c0_1 = arith.constant 0 : index
    %c0_2 = arith.constant 0 : index
    %1 = vector.load %arg2[%c0_1, %c0_2] : memref<100x32xf32, #tpu.memory_space<vmem>>, vector<100x32xf32>
    %cst = arith.constant dense<0.000000e+00> : vector<2x32xf32>
    %2 = tpu.matmul %0, %1, %cst {dimension_numbers = #tpu.dot_dimension_numbers<[1], [0], [0], [1], [0, 0, 1, 1], [], []>, precision = #tpu.contract_precision<fp32>} : vector<2x100xf32>, vector<100x32xf32>, vector<2x32xf32> -> vector<2x32xf32>
    %c0_3 = arith.constant 0 : index
    %c0_4 = arith.constant 0 : index
    %3 = vector.load %arg3[%c0_3, %c0_4] : memref<1x32xf32, #tpu.memory_space<vmem>>, vector<1x32xf32>
    %4 = vector.broadcast %3 : vector<1x32xf32> to vector<2x32xf32>
    %5 = arith.addf %2, %4 : vector<2x32xf32>
    %cst_5 = arith.constant 0.000000e+00 : f32
    %6 = vector.broadcast %cst_5 : f32 to vector<2x32xf32>
    %7 = arith.maximumf %5, %6 : vector<2x32xf32>
    %c0_6 = arith.constant 0 : index
    %c0_7 = arith.constant 0 : index
    %8 = vector.load %arg4[%c0_6, %c0_7] : memref<32x8xf32, #tpu.memory_space<vmem>>, vector<32x8xf32>
    %cst_8 = arith.constant dense<0.000000e+00> : vector<2x8xf32>
    %9 = tpu.matmul %7, %8, %cst_8 {dimension_numbers = #tpu.dot_dimension_numbers<[1], [0], [0], [1], [0, 0, 1, 1], [], []>, precision = #tpu.contract_precision<fp32>} : vector<2x32xf32>, vector<32x8xf32>, vector<2x8xf32> -> vector<2x8xf32>
    %c0_9 = arith.constant 0 : index
    %c0_10 = arith.constant 0 : index
    %10 = vector.load %arg5[%c0_9, %c0_10] : memref<1x8xf32, #tpu.memory_space<vmem>>, vector<1x8xf32>
    %11 = vector.broadcast %10 : vector<1x8xf32> to vector<2x8xf32>
    %12 = arith.addf %9, %11 : vector<2x8xf32>
    %cst_11 = arith.constant 0.000000e+00 : f32
    %13 = vector.broadcast %cst_11 : f32 to vector<2x8xf32>
    %14 = arith.maximumf %12, %13 : vector<2x8xf32>
    %c0_12 = arith.constant 0 : index
    %c0_13 = arith.constant 0 : index
    %15 = vector.load %arg6[%c0_12, %c0_13] : memref<8x32xf32, #tpu.memory_space<vmem>>, vector<8x32xf32>
    %cst_14 = arith.constant dense<0.000000e+00> : vector<2x32xf32>
    %16 = tpu.matmul %14, %15, %cst_14 {dimension_numbers = #tpu.dot_dimension_numbers<[1], [0], [0], [1], [0, 0, 1, 1], [], []>, precision = #tpu.contract_precision<fp32>} : vector<2x8xf32>, vector<8x32xf32>, vector<2x32xf32> -> vector<2x32xf32>
    %c0_15 = arith.constant 0 : index
    %c0_16 = arith.constant 0 : index
    %17 = vector.load %arg7[%c0_15, %c0_16] : memref<1x32xf32, #tpu.memory_space<vmem>>, vector<1x32xf32>
    %18 = vector.broadcast %17 : vector<1x32xf32> to vector<2x32xf32>
    %19 = arith.addf %16, %18 : vector<2x32xf32>
    %cst_17 = arith.constant 0.000000e+00 : f32
    %20 = vector.broadcast %cst_17 : f32 to vector<2x32xf32>
    %21 = arith.maximumf %19, %20 : vector<2x32xf32>
    %c0_18 = arith.constant 0 : index
    %c0_19 = arith.constant 0 : index
    %22 = vector.load %arg8[%c0_18, %c0_19] : memref<32x100xf32, #tpu.memory_space<vmem>>, vector<32x100xf32>
    %cst_20 = arith.constant dense<0.000000e+00> : vector<2x100xf32>
    %23 = tpu.matmul %21, %22, %cst_20 {dimension_numbers = #tpu.dot_dimension_numbers<[1], [0], [0], [1], [0, 0, 1, 1], [], []>, precision = #tpu.contract_precision<fp32>} : vector<2x32xf32>, vector<32x100xf32>, vector<2x100xf32> -> vector<2x100xf32>
    %c0_21 = arith.constant 0 : index
    %c0_22 = arith.constant 0 : index
    %24 = vector.load %arg9[%c0_21, %c0_22] : memref<1x100xf32, #tpu.memory_space<vmem>>, vector<1x100xf32>
    %25 = vector.broadcast %24 : vector<1x100xf32> to vector<2x100xf32>
    %26 = arith.addf %23, %25 : vector<2x100xf32>
    %c0_23 = arith.constant 0 : index
    %c0_24 = arith.constant 0 : index
    %27 = vector.load %arg10[%c0_23, %c0_24] : memref<2x100xf32, #tpu.memory_space<vmem>>, vector<2x100xf32>
    tpu.vector_store %arg10[%c0_23, %c0_24], %26 {strides = array<i32>} : memref<2x100xf32, #tpu.memory_space<vmem>>, vector<2x100xf32>,
    return
  }
  func.func @transform_0(%arg0: i32) -> (i32, i32) {
    %c0_i32 = arith.constant 0 : i32
    %c0_i32_0 = arith.constant 0 : i32
    return %arg0, %c0_i32 : i32, i32
  }
  func.func @transform_1(%arg0: i32) -> (i32, i32) {
    %c0_i32 = arith.constant 0 : i32
    %c0_i32_0 = arith.constant 0 : i32
    %c0_i32_1 = arith.constant 0 : i32
    return %c0_i32, %c0_i32_0 : i32, i32
  }
  func.func @transform_2(%arg0: i32) -> (i32, i32) {
    %c0_i32 = arith.constant 0 : i32
    %c0_i32_0 = arith.constant 0 : i32
    %c0_i32_1 = arith.constant 0 : i32
    return %c0_i32, %c0_i32_0 : i32, i32
  }
  func.func @transform_3(%arg0: i32) -> (i32, i32) {
    %c0_i32 = arith.constant 0 : i32
    %c0_i32_0 = arith.constant 0 : i32
    %c0_i32_1 = arith.constant 0 : i32
    return %c0_i32, %c0_i32_0 : i32, i32
  }
  func.func @transform_4(%arg0: i32) -> (i32, i32) {
    %c0_i32 = arith.constant 0 : i32
    %c0_i32_0 = arith.constant 0 : i32
    %c0_i32_1 = arith.constant 0 : i32
    return %c0_i32, %c0_i32_0 : i32, i32
  }
  func.func @transform_5(%arg0: i32) -> (i32, i32) {
    %c0_i32 = arith.constant 0 : i32
    %c0_i32_0 = arith.constant 0 : i32
    %c0_i32_1 = arith.constant 0 : i32
    return %c0_i32, %c0_i32_0 : i32, i32
  }
  func.func @transform_6(%arg0: i32) -> (i32, i32) {
    %c0_i32 = arith.constant 0 : i32
    %c0_i32_0 = arith.constant 0 : i32
    %c0_i32_1 = arith.constant 0 : i32
    return %c0_i32, %c0_i32_0 : i32, i32
  }
  func.func @transform_7(%arg0: i32) -> (i32, i32) {
    %c0_i32 = arith.constant 0 : i32
    %c0_i32_0 = arith.constant 0 : i32
    %c0_i32_1 = arith.constant 0 : i32
    return %c0_i32, %c0_i32_0 : i32, i32
  }
  func.func @transform_8(%arg0: i32) -> (i32, i32) {
    %c0_i32 = arith.constant 0 : i32
    %c0_i32_0 = arith.constant 0 : i32
    %c0_i32_1 = arith.constant 0 : i32
    return %c0_i32, %c0_i32_0 : i32, i32
  }
  func.func @transform_9(%arg0: i32) -> (i32, i32) {
    %c0_i32 = arith.constant 0 : i32
    %c0_i32_0 = arith.constant 0 : i32
    return %arg0, %c0_i32 : i32, i32
  }
}

</mosaic_0001>

<llo_original>
// kernel: band_generator_forward.1
$region0: #{band_generator_forward.1}
  #allocation0 [shape = 'u32[]', space=smem, size = 0x4, offset = 0x4, fixed_abs, tag = 'smem constant byte address 0x4 - core index']
  #allocation1 [shape = 'u32[144,128]{1,0:T(1,128)}', space=vmem, size = 0x12000, scoped, tag = 'internal scratch']
  %s0 = inlined_call_operand.vmem [shape: f32[2,100], index: 0, kind: input, shape index: {}]
  %s1 = inlined_call_operand.vmem [shape: f32[100,32], index: 1, kind: input, shape index: {}]
  %s2 = inlined_call_operand.vmem [shape: f32[1,32], index: 2, kind: input, shape index: {}]
  %s3 = inlined_call_operand.vmem [shape: f32[32,8], index: 3, kind: input, shape index: {}]
  %s4 = inlined_call_operand.vmem [shape: f32[1,8], index: 4, kind: input, shape index: {}]
  %s5 = inlined_call_operand.vmem [shape: f32[8,32], index: 5, kind: input, shape index: {}]
  %s6 = inlined_call_operand.vmem [shape: f32[1,32], index: 6, kind: input, shape index: {}]
  %s7 = inlined_call_operand.vmem [shape: f32[32,100], index: 7, kind: input, shape index: {}]
  %s8 = inlined_call_operand.vmem [shape: f32[1,100], index: 8, kind: input, shape index: {}]
  %s9 = inlined_call_operand.vmem [shape: f32[2,100], index: 9, kind: output, shape index: {}]
  %s10 = sld [smem:[#allocation0]]
  $region46: #{band_generator_forward.1} parent=0
    _
  %s12 = ssub.s32 1, %s10
  %s13 = scalar_select 0, %s12, %s10
  // Predicated region
  $region2: #{band_generator_forward.1} parent=0 // pred_check
    _
  $region3: #{band_generator_forward.1} parent=0 // pred_check_branch
    %15 = sbr.rel (0) target = $region5
  $region4: #{band_generator_forward.1} parent=0 // pred_region
    _
  $region5: #{band_generator_forward.1} parent=0 // pred_fallthru
    _
  // Predicated region
  $region6: #{band_generator_forward.1} parent=0 // pred_check
    _
  $region7: #{band_generator_forward.1} parent=0 // pred_check_branch
    %17 = sbr.rel (0) target = $region9
  $region8: #{band_generator_forward.1} parent=0 // pred_region
    _
  $region9: #{band_generator_forward.1} parent=0 // pred_fallthru
    _
  // Predicated region
  $region10: #{band_generator_forward.1} parent=0 // pred_check
    _
  $region11: #{band_generator_forward.1} parent=0 // pred_check_branch
    %19 = sbr.rel (0) target = $region13
  $region12: #{band_generator_forward.1} parent=0 // pred_region
    _
  $region13: #{band_generator_forward.1} parent=0 // pred_fallthru
    _
  // Predicated region
  $region14: #{band_generator_forward.1} parent=0 // pred_check
    _
  $region15: #{band_generator_forward.1} parent=0 // pred_check_branch
    %21 = sbr.rel (0) target = $region17
  $region16: #{band_generator_forward.1} parent=0 // pred_region
    _
  $region17: #{band_generator_forward.1} parent=0 // pred_fallthru
    _
  // Predicated region
  $region18: #{band_generator_forward.1} parent=0 // pred_check
    _
  $region19: #{band_generator_forward.1} parent=0 // pred_check_branch
    %23 = sbr.rel (0) target = $region21
  $region20: #{band_generator_forward.1} parent=0 // pred_region
    _
  $region21: #{band_generator_forward.1} parent=0 // pred_fallthru
    _
  // Predicated region
  $region22: #{band_generator_forward.1} parent=0 // pred_check
    _
  $region23: #{band_generator_forward.1} parent=0 // pred_check_branch
    %25 = sbr.rel (0) target = $region25
  $region24: #{band_generator_forward.1} parent=0 // pred_region
    _
  $region25: #{band_generator_forward.1} parent=0 // pred_fallthru
    _
  // Predicated region
  $region26: #{band_generator_forward.1} parent=0 // pred_check
    _
  $region27: #{band_generator_forward.1} parent=0 // pred_check_branch
    %27 = sbr.rel (0) target = $region29
  $region28: #{band_generator_forward.1} parent=0 // pred_region
    _
  $region29: #{band_generator_forward.1} parent=0 // pred_fallthru
    _
  // Predicated region
  $region30: #{band_generator_forward.1} parent=0 // pred_check
    _
  $region31: #{band_generator_forward.1} parent=0 // pred_check_branch
    %29 = sbr.rel (0) target = $region33
  $region32: #{band_generator_forward.1} parent=0 // pred_region
    _
  $region33: #{band_generator_forward.1} parent=0 // pred_fallthru
    _
  // Predicated region
  $region34: #{band_generator_forward.1} parent=0 // pred_check
    _
  $region35: #{band_generator_forward.1} parent=0 // pred_check_branch
    %31 = sbr.rel (0) target = $region37
  $region36: #{band_generator_forward.1} parent=0 // pred_region
    _
  $region37: #{band_generator_forward.1} parent=0 // pred_fallthru
    _
  %v32 = vld [vmem:[%s0] sm:$0x3]
  %v33 = vld [vmem:[%s1] sm:$0xff]
  %v34 = vld [vmem:[%s1 + $0x8] sm:$0xff]
  %v35 = vld [vmem:[%s1 + $0x10] sm:$0xff]
  %v36 = vld [vmem:[%s1 + $0x18] sm:$0xff]
  %v37 = vld [vmem:[%s1 + $0x20] sm:$0xff]
  %v38 = vld [vmem:[%s1 + $0x28] sm:$0xff]
  %v39 = vld [vmem:[%s1 + $0x30] sm:$0xff]
  %v40 = vld [vmem:[%s1 + $0x38] sm:$0xff]
  %v41 = vld [vmem:[%s1 + $0x40] sm:$0xff]
  %v42 = vld [vmem:[%s1 + $0x48] sm:$0xff]
  %v43 = vld [vmem:[%s1 + $0x50] sm:$0xff]
  %v44 = vld [vmem:[%s1 + $0x58] sm:$0xff]
  %v45 = vld [vmem:[%s1 + $0x60] sm:$0xf]
  %v46 = vld [vmem:[%s2] sm:$0x1]
  %v48 = vlaneseq
  %v49 = vshrl.u32 %v48, 7
  %v50 = vsub.s32 0, %v49
  %v51 = vrot.slane %v46, %v50
  %vm53 = vcmask 818176
  %v55 = vsel %vm53, %v32, 0
  %vm57 = vcmask 1043456
  %v59 = vsel %vm57, %v45, 0
  %61 = vmatprep.subr.mxu0 0.0
  %v62 = vand.u32 %v33, 4294901760
  %63 = vmatpush1.msra.mxu0 %v62
  %64 = vmatprep.subr.mxu0 0.0
  %v65 = vand.u32 %v34, 4294901760
  %66 = vmatpush1.msra.mxu0 %v65
  %67 = vmatprep.subr.mxu0 0.0
  %v68 = vand.u32 %v35, 4294901760
  %69 = vmatpush1.msra.mxu0 %v68
  %70 = vmatprep.subr.mxu0 0.0
  %v71 = vand.u32 %v36, 4294901760
  %72 = vmatpush1.msra.mxu0 %v71
  %73 = vmatprep.subr.mxu0 0.0
  %v74 = vand.u32 %v37, 4294901760
  %75 = vmatpush1.msra.mxu0 %v74
  %76 = vmatprep.subr.mxu0 0.0
  %v77 = vand.u32 %v38, 4294901760
  %78 = vmatpush1.msra.mxu0 %v77
  %79 = vmatprep.subr.mxu0 0.0
  %v80 = vand.u32 %v39, 4294901760
  %81 = vmatpush1.msra.mxu0 %v80
  %82 = vmatprep.subr.mxu0 0.0
  %v83 = vand.u32 %v40, 4294901760
  %84 = vmatpush1.msra.mxu0 %v83
  %85 = vmatprep.subr.mxu0 0.0
  %v86 = vand.u32 %v41, 4294901760
  %87 = vmatpush1.msra.mxu0 %v86
  %88 = vmatprep.subr.mxu0 0.0
  %v89 = vand.u32 %v42, 4294901760
  %90 = vmatpush1.msra.mxu0 %v89
  %91 = vmatprep.subr.mxu0 0.0
  %v92 = vand.u32 %v43, 4294901760
  %93 = vmatpush1.msra.mxu0 %v92
  %94 = vmatprep.subr.mxu0 0.0
  %v95 = vand.u32 %v44, 4294901760
  %96 = vmatpush1.msra.mxu0 %v95
  %97 = vmatprep.subr.mxu0 0.0
  %v98 = vand.u32 %v59, 4294901760
  %99 = vmatpush1.msra.mxu0 %v98
  %100 = vmatprep.subr.mxu0 0.0
  %101 = vmatpush1.msra.mxu0 0.0
  %102 = vmatprep.subr.mxu0 0.0
  %103 = vmatpush1.msra.mxu0 0.0
  %104 = vmatprep.subr.mxu0 0.0
  %105 = vmatpush1.msra.mxu0 0.0
  %106 = vmatprep.subr.mxu0 0.0
  %107 = vmatpush1.msra.mxu0 0.0
  %108 = vmatprep.subr.mxu0 0.0
  %109 = vmatpush1.msra.mxu0 0.0
  %110 = vmatprep.subr.mxu0 0.0
  %111 = vmatpush1.msra.mxu0 0.0
  %112 = vmatprep.subr.mxu0 0.0
  %113 = vmatpush1.msra.mxu0 0.0
  %114 = vmatprep.subr.mxu0 0.0
  %115 = vmatpush1.msra.mxu0 0.0
  %116 = vmatprep.subr.mxu0 0.0
  %117 = vmatpush1.msra.mxu0 0.0
  %118 = vmatprep.subr.mxu0 0.0
  %119 = vmatpush1.msra.mxu0 0.0
  %120 = vmatprep.subr.mxu0 0.0
  %121 = vmatpush1.msra.mxu0 0.0
  %122 = vmatprep.subr.mxu0 0.0
  %123 = vmatpush1.msra.mxu0 0.0
  %124 = vmatprep.subr.mxu0 0.0
  %125 = vmatpush1.msra.mxu0 0.0
  %126 = vmatprep.subr.mxu0 0.0
  %127 = vmatpush1.msra.mxu0 0.0
  %128 = vmatprep.subr.mxu0 0.0
  %129 = vmatpush1.msra.mxu0 0.0
  %130 = vmatprep.subr.mxu0 0.0
  %131 = vmatpush1.msra.mxu0 0.0
  %132 = vmatprep.subr.mxu0 0.0
  %133 = vmatpush1.msra.mxu0 0.0
  %134 = vmatprep.subr.mxu0 0.0
  %135 = vmatpush1.msra.mxu0 0.0
  %136 = vmatprep.subr.mxu0 0.0
  %137 = vmatpush1.msra.mxu0 0.0
  %138 = vmatprep.mubr.f32.mxu0 0.0
  %v139 = vand.u32 %v55, 4294901760
  %v140 = vsub.f32 %v55, %v139
  %v141 = vand.u32 %v140, 4294901760
  %v142 = vsub.f32 %v140, %v141
  %v143 = vand.u32 %v142, 4294901760
  %144 = vmatmul.mubr.f32.gmra.mrb[0].mxu0 %v143
  %v145 = vpop.f32.mrb[0].mxu0
  %v146 = vadd.f32 %v51, %v145
  %v147 = vpop.f32.mrb[0].mxu0
  %148 = vdwg.mxu0
  %149 = vmatprep.subr.mxu0 0.0
  %v150 = vand.u32 %v33, 4294901760
  %v151 = vsub.f32 %v33, %v150
  %v152 = vand.u32 %v151, 4294901760
  %v153 = vsub.f32 %v151, %v152
  %v154 = vand.u32 %v153, 4294901760
  %155 = vmatpush1.msra.mxu0 %v154
  %156 = vmatprep.subr.mxu0 0.0
  %v157 = vand.u32 %v34, 4294901760
  %v158 = vsub.f32 %v34, %v157
  %v159 = vand.u32 %v158, 4294901760
  %v160 = vsub.f32 %v158, %v159
  %v161 = vand.u32 %v160, 4294901760
  %162 = vmatpush1.msra.mxu0 %v161
  %163 = vmatprep.subr.mxu0 0.0
  %v164 = vand.u32 %v35, 4294901760
  %v165 = vsub.f32 %v35, %v164
  %v166 = vand.u32 %v165, 4294901760
  %v167 = vsub.f32 %v165, %v166
  %v168 = vand.u32 %v167, 4294901760
  %169 = vmatpush1.msra.mxu0 %v168
  %170 = vmatprep.subr.mxu0 0.0
  %v171 = vand.u32 %v36, 4294901760
  %v172 = vsub.f32 %v36, %v171
  %v173 = vand.u32 %v172, 4294901760
  %v174 = vsub.f32 %v172, %v173
  %v175 = vand.u32 %v174, 4294901760
  %176 = vmatpush1.msra.mxu0 %v175
  %177 = vmatprep.subr.mxu0 0.0
  %v178 = vand.u32 %v37, 4294901760
  %v179 = vsub.f32 %v37, %v178
  %v180 = vand.u32 %v179, 4294901760
  %v181 = vsub.f32 %v179, %v180
  %v182 = vand.u32 %v181, 4294901760
  %183 = vmatpush1.msra.mxu0 %v182
  %184 = vmatprep.subr.mxu0 0.0
  %v185 = vand.u32 %v38, 4294901760
  %v186 = vsub.f32 %v38, %v185
  %v187 = vand.u32 %v186, 4294901760
  %v188 = vsub.f32 %v186, %v187
  %v189 = vand.u32 %v188, 4294901760
  %190 = vmatpush1.msra.mxu0 %v189
  %191 = vmatprep.subr.mxu0 0.0
  %v192 = vand.u32 %v39, 4294901760
  %v193 = vsub.f32 %v39, %v192
  %v194 = vand.u32 %v193, 4294901760
  %v195 = vsub.f32 %v193, %v194
  %v196 = vand.u32 %v195, 4294901760
  %197 = vmatpush1.msra.mxu0 %v196
  %198 = vmatprep.subr.mxu0 0.0
  %v199 = vand.u32 %v40, 4294901760
  %v200 = vsub.f32 %v40, %v199
  %v201 = vand.u32 %v200, 4294901760
  %v202 = vsub.f32 %v200, %v201
  %v203 = vand.u32 %v202, 4294901760
  %204 = vmatpush1.msra.mxu0 %v203
  %205 = vmatprep.subr.mxu0 0.0
  %v206 = vand.u32 %v41, 4294901760
  %v207 = vsub.f32 %v41, %v206
  %v208 = vand.u32 %v207, 4294901760
  %v209 = vsub.f32 %v207, %v208
  %v210 = vand.u32 %v209, 4294901760
  %211 = vmatpush1.msra.mxu0 %v210
  %212 = vmatprep.subr.mxu0 0.0
  %v213 = vand.u32 %v42, 4294901760
  %v214 = vsub.f32 %v42, %v213
  %v215 = vand.u32 %v214, 4294901760
  %v216 = vsub.f32 %v214, %v215
  %v217 = vand.u32 %v216, 4294901760
  %218 = vmatpush1.msra.mxu0 %v217
  %219 = vmatprep.subr.mxu0 0.0
  %v220 = vand.u32 %v43, 4294901760
  %v221 = vsub.f32 %v43, %v220
  %v222 = vand.u32 %v221, 4294901760
  %v223 = vsub.f32 %v221, %v222
  %v224 = vand.u32 %v223, 4294901760
  %225 = vmatpush1.msra.mxu0 %v224
  %226 = vmatprep.subr.mxu0 0.0
  %v227 = vand.u32 %v44, 4294901760
  %v228 = vsub.f32 %v44, %v227
  %v229 = vand.u32 %v228, 4294901760
  %v230 = vsub.f32 %v228, %v229
  %v231 = vand.u32 %v230, 4294901760
  %232 = vmatpush1.msra.mxu0 %v231
  %233 = vmatprep.subr.mxu0 0.0
  %v234 = vand.u32 %v59, 4294901760
  %v235 = vsub.f32 %v59, %v234
  %v236 = vand.u32 %v235, 4294901760
  %v237 = vsub.f32 %v235, %v236
  %v238 = vand.u32 %v237, 4294901760
  %239 = vmatpush1.msra.mxu0 %v238
  %240 = vmatprep.subr.mxu0 0.0
  %241 = vmatpush1.msra.mxu0 0.0
  %242 = vmatprep.subr.mxu0 0.0
  %243 = vmatpush1.msra.mxu0 0.0
  %244 = vmatprep.subr.mxu0 0.0
  %245 = vmatpush1.msra.mxu0 0.0
  %246 = vmatprep.subr.mxu0 0.0
  %247 = vmatpush1.msra.mxu0 0.0
  %248 = vmatprep.subr.mxu0 0.0
  %249 = vmatpush1.msra.mxu0 0.0
  %250 = vmatprep.subr.mxu0 0.0
  %251 = vmatpush1.msra.mxu0 0.0
  %252 = vmatprep.subr.mxu0 0.0
  %253 = vmatpush1.msra.mxu0 0.0
  %254 = vmatprep.subr.mxu0 0.0
  %255 = vmatpush1.msra.mxu0 0.0
  %256 = vmatprep.subr.mxu0 0.0
  %257 = vmatpush1.msra.mxu0 0.0
  %258 = vmatprep.subr.mxu0 0.0
  %259 = vmatpush1.msra.mxu0 0.0
  %260 = vmatprep.subr.mxu0 0.0
  %261 = vmatpush1.msra.mxu0 0.0
  %262 = vmatprep.subr.mxu0 0.0
  %263 = vmatpush1.msra.mxu0 0.0
  %264 = vmatprep.subr.mxu0 0.0
  %265 = vmatpush1.msra.mxu0 0.0
  %266 = vmatprep.subr.mxu0 0.0
  %267 = vmatpush1.msra.mxu0 0.0
  %268 = vmatprep.subr.mxu0 0.0
  %269 = vmatpush1.msra.mxu0 0.0
  %270 = vmatprep.subr.mxu0 0.0
  %271 = vmatpush1.msra.mxu0 0.0
  %272 = vmatprep.subr.mxu0 0.0
  %273 = vmatpush1.msra.mxu0 0.0
  %274 = vmatprep.subr.mxu0 0.0
  %275 = vmatpush1.msra.mxu0 0.0
  %276 = vmatprep.subr.mxu0 0.0
  %277 = vmatpush1.msra.mxu0 0.0
  %278 = vmatprep.mubr.f32.mxu0 0.0
  %v279 = vand.u32 %v55, 4294901760
  %280 = vmatmul.mubr.f32.gmra.mrb[0].mxu0 %v279
  %v281 = vpop.f32.mrb[0].mxu0
  %v282 = vadd.f32 %v146, %v281
  %v283 = vpop.f32.mrb[0].mxu0
  %284 = vdwg.mxu0
  %285 = vmatprep.subr.mxu0 0.0
  %v286 = vand.u32 %v33, 4294901760
  %v287 = vsub.f32 %v33, %v286
  %288 = vmatpush1.msra.mxu0 %v287
  %289 = vmatprep.subr.mxu0 0.0
  %v290 = vand.u32 %v34, 4294901760
  %v291 = vsub.f32 %v34, %v290
  %292 = vmatpush1.msra.mxu0 %v291
  %293 = vmatprep.subr.mxu0 0.0
  %v294 = vand.u32 %v35, 4294901760
  %v295 = vsub.f32 %v35, %v294
  %296 = vmatpush1.msra.mxu0 %v295
  %297 = vmatprep.subr.mxu0 0.0
  %v298 = vand.u32 %v36, 4294901760
  %v299 = vsub.f32 %v36, %v298
  %300 = vmatpush1.msra.mxu0 %v299
  %301 = vmatprep.subr.mxu0 0.0
  %v302 = vand.u32 %v37, 4294901760
  %v303 = vsub.f32 %v37, %v302
  %304 = vmatpush1.msra.mxu0 %v303
  %305 = vmatprep.subr.mxu0 0.0
  %v306 = vand.u32 %v38, 4294901760
  %v307 = vsub.f32 %v38, %v306
  %308 = vmatpush1.msra.mxu0 %v307
  %309 = vmatprep.subr.mxu0 0.0
  %v310 = vand.u32 %v39, 4294901760
  %v311 = vsub.f32 %v39, %v310
  %312 = vmatpush1.msra.mxu0 %v311
  %313 = vmatprep.subr.mxu0 0.0
  %v314 = vand.u32 %v40, 4294901760
  %v315 = vsub.f32 %v40, %v314
  %316 = vmatpush1.msra.mxu0 %v315
  %317 = vmatprep.subr.mxu0 0.0
  %v318 = vand.u32 %v41, 4294901760
  %v319 = vsub.f32 %v41, %v318
  %320 = vmatpush1.msra.mxu0 %v319
  %321 = vmatprep.subr.mxu0 0.0
  %v322 = vand.u32 %v42, 4294901760
  %v323 = vsub.f32 %v42, %v322
  %324 = vmatpush1.msra.mxu0 %v323
  %325 = vmatprep.subr.mxu0 0.0
  %v326 = vand.u32 %v43, 4294901760
  %v327 = vsub.f32 %v43, %v326
  %328 = vmatpush1.msra.mxu0 %v327
  %329 = vmatprep.subr.mxu0 0.0
  %v330 = vand.u32 %v44, 4294901760
  %v331 = vsub.f32 %v44, %v330
  %332 = vmatpush1.msra.mxu0 %v331
  %333 = vmatprep.subr.mxu0 0.0
  %v334 = vand.u32 %v59, 4294901760
  %v335 = vsub.f32 %v59, %v334
  %336 = vmatpush1.msra.mxu0 %v335
  %337 = vmatprep.subr.mxu0 0.0
  %338 = vmatpush1.msra.mxu0 0.0
  %339 = vmatprep.subr.mxu0 0.0
  %340 = vmatpush1.msra.mxu0 0.0
  %341 = vmatprep.subr.mxu0 0.0
  %342 = vmatpush1.msra.mxu0 0.0
  %343 = vmatprep.subr.mxu0 0.0
  %344 = vmatpush1.msra.mxu0 0.0
  %345 = vmatprep.subr.mxu0 0.0
  %346 = vmatpush1.msra.mxu0 0.0
  %347 = vmatprep.subr.mxu0 0.0
  %348 = vmatpush1.msra.mxu0 0.0
  %349 = vmatprep.subr.mxu0 0.0
  %350 = vmatpush1.msra.mxu0 0.0
  %351 = vmatprep.subr.mxu0 0.0
  %352 = vmatpush1.msra.mxu0 0.0
  %353 = vmatprep.subr.mxu0 0.0
  %354 = vmatpush1.msra.mxu0 0.0
  %355 = vmatprep.subr.mxu0 0.0
  %356 = vmatpush1.msra.mxu0 0.0
  %357 = vmatprep.subr.mxu0 0.0
  %358 = vmatpush1.msra.mxu0 0.0
  %359 = vmatprep.subr.mxu0 0.0
  %360 = vmatpush1.msra.mxu0 0.0
  %361 = vmatprep.subr.mxu0 0.0
  %362 = vmatpush1.msra.mxu0 0.0
  %363 = vmatprep.subr.mxu0 0.0
  %364 = vmatpush1.msra.mxu0 0.0
  %365 = vmatprep.subr.mxu0 0.0
  %366 = vmatpush1.msra.mxu0 0.0
  %367 = vmatprep.subr.mxu0 0.0
  %368 = vmatpush1.msra.mxu0 0.0
  %369 = vmatprep.subr.mxu0 0.0
  %370 = vmatpush1.msra.mxu0 0.0
  %371 = vmatprep.subr.mxu0 0.0
  %372 = vmatpush1.msra.mxu0 0.0
  %373 = vmatprep.subr.mxu0 0.0
  %374 = vmatpush1.msra.mxu0 0.0
  %375 = vmatprep.mubr.f32.mxu0 0.0
  %v376 = vand.u32 %v55, 4294901760
  %v377 = vsub.f32 %v55, %v376
  %378 = vmatmul.mubr.f32.gmra.mrb[0].mxu0 %v377
  %v379 = vpop.f32.mrb[0].mxu0
  %v380 = vadd.f32 %v282, %v379
  %v381 = vpop.f32.mrb[0].mxu0
  %382 = vdwg.mxu0
  %383 = vmatprep.subr.mxu0 0.0
  %v384 = vand.u32 %v33, 4294901760
  %385 = vmatpush1.msra.mxu0 %v384
  %386 = vmatprep.subr.mxu0 0.0
  %v387 = vand.u32 %v34, 4294901760
  %388 = vmatpush1.msra.mxu0 %v387
  %389 = vmatprep.subr.mxu0 0.0
  %v390 = vand.u32 %v35, 4294901760
  %391 = vmatpush1.msra.mxu0 %v390
  %392 = vmatprep.subr.mxu0 0.0
  %v393 = vand.u32 %v36, 4294901760
  %394 = vmatpush1.msra.mxu0 %v393
  %395 = vmatprep.subr.mxu0 0.0
  %v396 = vand.u32 %v37, 4294901760
  %397 = vmatpush1.msra.mxu0 %v396
  %398 = vmatprep.subr.mxu0 0.0
  %v399 = vand.u32 %v38, 4294901760
  %400 = vmatpush1.msra.mxu0 %v399
  %401 = vmatprep.subr.mxu0 0.0
  %v402 = vand.u32 %v39, 4294901760
  %403 = vmatpush1.msra.mxu0 %v402
  %404 = vmatprep.subr.mxu0 0.0
  %v405 = vand.u32 %v40, 4294901760
  %406 = vmatpush1.msra.mxu0 %v405
  %407 = vmatprep.subr.mxu0 0.0
  %v408 = vand.u32 %v41, 4294901760
  %409 = vmatpush1.msra.mxu0 %v408
  %410 = vmatprep.subr.mxu0 0.0
  %v411 = vand.u32 %v42, 4294901760
  %412 = vmatpush1.msra.mxu0 %v411
  %413 = vmatprep.subr.mxu0 0.0
  %v414 = vand.u32 %v43, 4294901760
  %415 = vmatpush1.msra.mxu0 %v414
  %416 = vmatprep.subr.mxu0 0.0
  %v417 = vand.u32 %v44, 4294901760
  %418 = vmatpush1.msra.mxu0 %v417
  %419 = vmatprep.subr.mxu0 0.0
  %v420 = vand.u32 %v59, 4294901760
  %421 = vmatpush1.msra.mxu0 %v420
  %422 = vmatprep.subr.mxu0 0.0
  %423 = vmatpush1.msra.mxu0 0.0
  %424 = vmatprep.subr.mxu0 0.0
  %425 = vmatpush1.msra.mxu0 0.0
  %426 = vmatprep.subr.mxu0 0.0
  %427 = vmatpush1.msra.mxu0 0.0
  %428 = vmatprep.subr.mxu0 0.0
  %429 = vmatpush1.msra.mxu0 0.0
  %430 = vmatprep.subr.mxu0 0.0
  %431 = vmatpush1.msra.mxu0 0.0
  %432 = vmatprep.subr.mxu0 0.0
  %433 = vmatpush1.msra.mxu0 0.0
  %434 = vmatprep.subr.mxu0 0.0
  %435 = vmatpush1.msra.mxu0 0.0
  %436 = vmatprep.subr.mxu0 0.0
  %437 = vmatpush1.msra.mxu0 0.0
  %438 = vmatprep.subr.mxu0 0.0
  %439 = vmatpush1.msra.mxu0 0.0
  %440 = vmatprep.subr.mxu0 0.0
  %441 = vmatpush1.msra.mxu0 0.0
  %442 = vmatprep.subr.mxu0 0.0
  %443 = vmatpush1.msra.mxu0 0.0
  %444 = vmatprep.subr.mxu0 0.0
  %445 = vmatpush1.msra.mxu0 0.0
  %446 = vmatprep.subr.mxu0 0.0
  %447 = vmatpush1.msra.mxu0 0.0
  %448 = vmatprep.subr.mxu0 0.0
  %449 = vmatpush1.msra.mxu0 0.0
  %450 = vmatprep.subr.mxu0 0.0
  %451 = vmatpush1.msra.mxu0 0.0
  %452 = vmatprep.subr.mxu0 0.0
  %453 = vmatpush1.msra.mxu0 0.0
  %454 = vmatprep.subr.mxu0 0.0
  %455 = vmatpush1.msra.mxu0 0.0
  %456 = vmatprep.subr.mxu0 0.0
  %457 = vmatpush1.msra.mxu0 0.0
  %458 = vmatprep.subr.mxu0 0.0
  %459 = vmatpush1.msra.mxu0 0.0
  %460 = vmatprep.mubr.f32.mxu0 0.0
  %v461 = vand.u32 %v55, 4294901760
  %v462 = vsub.f32 %v55, %v461
  %v463 = vand.u32 %v462, 4294901760
  %464 = vmatmul.mubr.f32.gmra.mrb[0].mxu0 %v463
  %v465 = vpop.f32.mrb[0].mxu0
  %v466 = vadd.f32 %v380, %v465
  %v467 = vpop.f32.mrb[0].mxu0
  %468 = vdwg.mxu0
  %469 = vmatprep.subr.mxu0 0.0
  %v470 = vand.u32 %v33, 4294901760
  %v471 = vsub.f32 %v33, %v470
  %v472 = vand.u32 %v471, 4294901760
  %473 = vmatpush1.msra.mxu0 %v472
  %474 = vmatprep.subr.mxu0 0.0
  %v475 = vand.u32 %v34, 4294901760
  %v476 = vsub.f32 %v34, %v475
  %v477 = vand.u32 %v476, 4294901760
  %478 = vmatpush1.msra.mxu0 %v477
  %479 = vmatprep.subr.mxu0 0.0
  %v480 = vand.u32 %v35, 4294901760
  %v481 = vsub.f32 %v35, %v480
  %v482 = vand.u32 %v481, 4294901760
  %483 = vmatpush1.msra.mxu0 %v482
  %484 = vmatprep.subr.mxu0 0.0
  %v485 = vand.u32 %v36, 4294901760
  %v486 = vsub.f32 %v36, %v485
  %v487 = vand.u32 %v486, 4294901760
  %488 = vmatpush1.msra.mxu0 %v487
  %489 = vmatprep.subr.mxu0 0.0
  %v490 = vand.u32 %v37, 4294901760
  %v491 = vsub.f32 %v37, %v490
  %v492 = vand.u32 %v491, 4294901760
  %493 = vmatpush1.msra.mxu0 %v492
  %494 = vmatprep.subr.mxu0 0.0
  %v495 = vand.u32 %v38, 4294901760
  %v496 = vsub.f32 %v38, %v495
  %v497 = vand.u32 %v496, 4294901760
  %498 = vmatpush1.msra.mxu0 %v497
  %499 = vmatprep.subr.mxu0 0.0
  %v500 = vand.u32 %v39, 4294901760
  %v501 = vsub.f32 %v39, %v500
  %v502 = vand.u32 %v501, 4294901760
  %503 = vmatpush1.msra.mxu0 %v502
  %504 = vmatprep.subr.mxu0 0.0
  %v505 = vand.u32 %v40, 4294901760
  %v506 = vsub.f32 %v40, %v505
  %v507 = vand.u32 %v506, 4294901760
  %508 = vmatpush1.msra.mxu0 %v507
  %509 = vmatprep.subr.mxu0 0.0
  %v510 = vand.u32 %v41, 4294901760
  %v511 = vsub.f32 %v41, %v510
  %v512 = vand.u32 %v511, 4294901760
  %513 = vmatpush1.msra.mxu0 %v512
  %514 = vmatprep.subr.mxu0 0.0
  %v515 = vand.u32 %v42, 4294901760
  %v516 = vsub.f32 %v42, %v515
  %v517 = vand.u32 %v516, 4294901760
  %518 = vmatpush1.msra.mxu0 %v517
  %519 = vmatprep.subr.mxu0 0.0
  %v520 = vand.u32 %v43, 4294901760
  %v521 = vsub.f32 %v43, %v520
  %v522 = vand.u32 %v521, 4294901760
  %523 = vmatpush1.msra.mxu0 %v522
  %524 = vmatprep.subr.mxu0 0.0
  %v525 = vand.u32 %v44, 4294901760
  %v526 = vsub.f32 %v44, %v525
  %v527 = vand.u32 %v526, 4294901760
  %528 = vmatpush1.msra.mxu0 %v527
  %529 = vmatprep.subr.mxu0 0.0
  %v530 = vand.u32 %v59, 4294901760
  %v531 = vsub.f32 %v59, %v530
  %v532 = vand.u32 %v531, 4294901760
  %533 = vmatpush1.msra.mxu0 %v532
  %534 = vmatprep.subr.mxu0 0.0
  %535 = vmatpush1.msra.mxu0 0.0
  %536 = vmatprep.subr.mxu0 0.0
  %537 = vmatpush1.msra.mxu0 0.0
  %538 = vmatprep.subr.mxu0 0.0
  %539 = vmatpush1.msra.mxu0 0.0
  %540 = vmatprep.subr.mxu0 0.0
  %541 = vmatpush1.msra.mxu0 0.0
  %542 = vmatprep.subr.mxu0 0.0
  %543 = vmatpush1.msra.mxu0 0.0
  %544 = vmatprep.subr.mxu0 0.0
  %545 = vmatpush1.msra.mxu0 0.0
  %546 = vmatprep.subr.mxu0 0.0
  %547 = vmatpush1.msra.mxu0 0.0
  %548 = vmatprep.subr.mxu0 0.0
  %549 = vmatpush1.msra.mxu0 0.0
  %550 = vmatprep.subr.mxu0 0.0
  %551 = vmatpush1.msra.mxu0 0.0
  %552 = vmatprep.subr.mxu0 0.0
  %553 = vmatpush1.msra.mxu0 0.0
  %554 = vmatprep.subr.mxu0 0.0
  %555 = vmatpush1.msra.mxu0 0.0
  %556 = vmatprep.subr.mxu0 0.0
  %557 = vmatpush1.msra.mxu0 0.0
  %558 = vmatprep.subr.mxu0 0.0
  %559 = vmatpush1.msra.mxu0 0.0
  %560 = vmatprep.subr.mxu0 0.0
  %561 = vmatpush1.msra.mxu0 0.0
  %562 = vmatprep.subr.mxu0 0.0
  %563 = vmatpush1.msra.mxu0 0.0
  %564 = vmatprep.subr.mxu0 0.0
  %565 = vmatpush1.msra.mxu0 0.0
  %566 = vmatprep.subr.mxu0 0.0
  %567 = vmatpush1.msra.mxu0 0.0
  %568 = vmatprep.subr.mxu0 0.0
  %569 = vmatpush1.msra.mxu0 0.0
  %570 = vmatprep.subr.mxu0 0.0
  %571 = vmatpush1.msra.mxu0 0.0
  %572 = vmatprep.mubr.f32.mxu0 0.0
  %v573 = vand.u32 %v55, 4294901760
  %574 = vmatmul.mubr.f32.gmra.mrb[0].mxu0 %v573
  %v575 = vpop.f32.mrb[0].mxu0
  %v576 = vadd.f32 %v466, %v575
  %v577 = vpop.f32.mrb[0].mxu0
  %578 = vdwg.mxu0
  %579 = vmatprep.subr.mxu0 0.0
  %v580 = vand.u32 %v33, 4294901760
  %581 = vmatpush1.msra.mxu0 %v580
  %582 = vmatprep.subr.mxu0 0.0
  %v583 = vand.u32 %v34, 4294901760
  %584 = vmatpush1.msra.mxu0 %v583
  %585 = vmatprep.subr.mxu0 0.0
  %v586 = vand.u32 %v35, 4294901760
  %587 = vmatpush1.msra.mxu0 %v586
  %588 = vmatprep.subr.mxu0 0.0
  %v589 = vand.u32 %v36, 4294901760
  %590 = vmatpush1.msra.mxu0 %v589
  %591 = vmatprep.subr.mxu0 0.0
  %v592 = vand.u32 %v37, 4294901760
  %593 = vmatpush1.msra.mxu0 %v592
  %594 = vmatprep.subr.mxu0 0.0
  %v595 = vand.u32 %v38, 4294901760
  %596 = vmatpush1.msra.mxu0 %v595
  %597 = vmatprep.subr.mxu0 0.0
  %v598 = vand.u32 %v39, 4294901760
  %599 = vmatpush1.msra.mxu0 %v598
  %600 = vmatprep.subr.mxu0 0.0
  %v601 = vand.u32 %v40, 4294901760
  %602 = vmatpush1.msra.mxu0 %v601
  %603 = vmatprep.subr.mxu0 0.0
  %v604 = vand.u32 %v41, 4294901760
  %605 = vmatpush1.msra.mxu0 %v604
  %606 = vmatprep.subr.mxu0 0.0
  %v607 = vand.u32 %v42, 4294901760
  %608 = vmatpush1.msra.mxu0 %v607
  %609 = vmatprep.subr.mxu0 0.0
  %v610 = vand.u32 %v43, 4294901760
  %611 = vmatpush1.msra.mxu0 %v610
  %612 = vmatprep.subr.mxu0 0.0
  %v613 = vand.u32 %v44, 4294901760
  %614 = vmatpush1.msra.mxu0 %v613
  %615 = vmatprep.subr.mxu0 0.0
  %v616 = vand.u32 %v59, 4294901760
  %617 = vmatpush1.msra.mxu0 %v616
  %618 = vmatprep.subr.mxu0 0.0
  %619 = vmatpush1.msra.mxu0 0.0
  %620 = vmatprep.subr.mxu0 0.0
  %621 = vmatpush1.msra.mxu0 0.0
  %622 = vmatprep.subr.mxu0 0.0
  %623 = vmatpush1.msra.mxu0 0.0
  %624 = vmatprep.subr.mxu0 0.0
  %625 = vmatpush1.msra.mxu0 0.0
  %626 = vmatprep.subr.mxu0 0.0
  %627 = vmatpush1.msra.mxu0 0.0
  %628 = vmatprep.subr.mxu0 0.0
  %629 = vmatpush1.msra.mxu0 0.0
  %630 = vmatprep.subr.mxu0 0.0
  %631 = vmatpush1.msra.mxu0 0.0
  %632 = vmatprep.subr.mxu0 0.0
  %633 = vmatpush1.msra.mxu0 0.0
  %634 = vmatprep.subr.mxu0 0.0
  %635 = vmatpush1.msra.mxu0 0.0
  %636 = vmatprep.subr.mxu0 0.0
  %637 = vmatpush1.msra.mxu0 0.0
  %638 = vmatprep.subr.mxu0 0.0
  %639 = vmatpush1.msra.mxu0 0.0
  %640 = vmatprep.subr.mxu0 0.0
  %641 = vmatpush1.msra.mxu0 0.0
  %642 = vmatprep.subr.mxu0 0.0
  %643 = vmatpush1.msra.mxu0 0.0
  %644 = vmatprep.subr.mxu0 0.0
  %645 = vmatpush1.msra.mxu0 0.0
  %646 = vmatprep.subr.mxu0 0.0
  %647 = vmatpush1.msra.mxu0 0.0
  %648 = vmatprep.subr.mxu0 0.0
  %649 = vmatpush1.msra.mxu0 0.0
  %650 = vmatprep.subr.mxu0 0.0
  %651 = vmatpush1.msra.mxu0 0.0
  %652 = vmatprep.subr.mxu0 0.0
  %653 = vmatpush1.msra.mxu0 0.0
  %654 = vmatprep.subr.mxu0 0.0
  %655 = vmatpush1.msra.mxu0 0.0
  %656 = vmatprep.mubr.f32.mxu0 0.0
  %v657 = vand.u32 %v55, 4294901760
  %658 = vmatmul.mubr.f32.gmra.mrb[0].mxu0 %v657
  %v659 = vpop.f32.mrb[0].mxu0
  %v660 = vadd.f32 %v576, %v659
  %v661 = vpop.f32.mrb[0].mxu0
  %662 = vdwg.mxu0
  %v663 = vmax.f32 %v660, 0.0
  %v664 = vld [vmem:[%s3] sm:$0xff]
  %v665 = vld [vmem:[%s3 + $0x8] sm:$0xff]
  %v666 = vld [vmem:[%s3 + $0x10] sm:$0xff]
  %v667 = vld [vmem:[%s3 + $0x18] sm:$0xff]
  %v668 = vld [vmem:[%s4] sm:$0x1]
  %v670 = vlaneseq
  %v671 = vshrl.u32 %v670, 7
  %v672 = vsub.s32 0, %v671
  %v673 = vrot.slane %v668, %v672
  %vm675 = vcmask 261120
  %v677 = vsel %vm675, %v663, 0
  %679 = vmatprep.subr.mxu0 0.0
  %v680 = vand.u32 %v664, 4294901760
  %681 = vmatpush1.msra.mxu0 %v680
  %682 = vmatprep.subr.mxu0 0.0
  %v683 = vand.u32 %v665, 4294901760
  %684 = vmatpush1.msra.mxu0 %v683
  %685 = vmatprep.subr.mxu0 0.0
  %v686 = vand.u32 %v666, 4294901760
  %687 = vmatpush1.msra.mxu0 %v686
  %688 = vmatprep.subr.mxu0 0.0
  %v689 = vand.u32 %v667, 4294901760
  %690 = vmatpush1.msra.mxu0 %v689
  %691 = vmatprep.subr.mxu0 0.0
  %692 = vmatpush1.msra.mxu0 0.0
  %693 = vmatprep.subr.mxu0 0.0
  %694 = vmatpush1.msra.mxu0 0.0
  %695 = vmatprep.subr.mxu0 0.0
  %696 = vmatpush1.msra.mxu0 0.0
  %697 = vmatprep.subr.mxu0 0.0
  %698 = vmatpush1.msra.mxu0 0.0
  %699 = vmatprep.subr.mxu0 0.0
  %700 = vmatpush1.msra.mxu0 0.0
  %701 = vmatprep.subr.mxu0 0.0
  %702 = vmatpush1.msra.mxu0 0.0
  %703 = vmatprep.subr.mxu0 0.0
  %704 = vmatpush1.msra.mxu0 0.0
  %705 = vmatprep.subr.mxu0 0.0
  %706 = vmatpush1.msra.mxu0 0.0
  %707 = vmatprep.subr.mxu0 0.0
  %708 = vmatpush1.msra.mxu0 0.0
  %709 = vmatprep.subr.mxu0 0.0
  %710 = vmatpush1.msra.mxu0 0.0
  %711 = vmatprep.subr.mxu0 0.0
  %712 = vmatpush1.msra.mxu0 0.0
  %713 = vmatprep.subr.mxu0 0.0
  %714 = vmatpush1.msra.mxu0 0.0
  %715 = vmatprep.subr.mxu0 0.0
  %716 = vmatpush1.msra.mxu0 0.0
  %717 = vmatprep.subr.mxu0 0.0
  %718 = vmatpush1.msra.mxu0 0.0
  %719 = vmatprep.subr.mxu0 0.0
  %720 = vmatpush1.msra.mxu0 0.0
  %721 = vmatprep.subr.mxu0 0.0
  %722 = vmatpush1.msra.mxu0 0.0
  %723 = vmatprep.subr.mxu0 0.0
  %724 = vmatpush1.msra.mxu0 0.0
  %725 = vmatprep.subr.mxu0 0.0
  %726 = vmatpush1.msra.mxu0 0.0
  %727 = vmatprep.subr.mxu0 0.0
  %728 = vmatpush1.msra.mxu0 0.0
  %729 = vmatprep.subr.mxu0 0.0
  %730 = vmatpush1.msra.mxu0 0.0
  %731 = vmatprep.subr.mxu0 0.0
  %732 = vmatpush1.msra.mxu0 0.0
  %733 = vmatprep.subr.mxu0 0.0
  %734 = vmatpush1.msra.mxu0 0.0
  %735 = vmatprep.subr.mxu0 0.0
  %736 = vmatpush1.msra.mxu0 0.0
  %737 = vmatprep.subr.mxu0 0.0
  %738 = vmatpush1.msra.mxu0 0.0
  %739 = vmatprep.subr.mxu0 0.0
  %740 = vmatpush1.msra.mxu0 0.0
  %741 = vmatprep.subr.mxu0 0.0
  %742 = vmatpush1.msra.mxu0 0.0
  %743 = vmatprep.subr.mxu0 0.0
  %744 = vmatpush1.msra.mxu0 0.0
  %745 = vmatprep.subr.mxu0 0.0
  %746 = vmatpush1.msra.mxu0 0.0
  %747 = vmatprep.mubr.f32.mxu0 0.0
  %v748 = vand.u32 %v677, 4294901760
  %v749 = vsub.f32 %v677, %v748
  %v750 = vand.u32 %v749, 4294901760
  %v751 = vsub.f32 %v749, %v750
  %v752 = vand.u32 %v751, 4294901760
  %753 = vmatmul.mubr.f32.gmra.mrb[0].mxu0 %v752
  %v754 = vpop.f32.mrb[0].mxu0
  %v755 = vadd.f32 %v673, %v754
  %v756 = vpop.f32.mrb[0].mxu0
  %757 = vdwg.mxu0
  %758 = vmatprep.subr.mxu0 0.0
  %v759 = vand.u32 %v664, 4294901760
  %v760 = vsub.f32 %v664, %v759
  %v761 = vand.u32 %v760, 4294901760
  %v762 = vsub.f32 %v760, %v761
  %v763 = vand.u32 %v762, 4294901760
  %764 = vmatpush1.msra.mxu0 %v763
  %765 = vmatprep.subr.mxu0 0.0
  %v766 = vand.u32 %v665, 4294901760
  %v767 = vsub.f32 %v665, %v766
  %v768 = vand.u32 %v767, 4294901760
  %v769 = vsub.f32 %v767, %v768
  %v770 = vand.u32 %v769, 4294901760
  %771 = vmatpush1.msra.mxu0 %v770
  %772 = vmatprep.subr.mxu0 0.0
  %v773 = vand.u32 %v666, 4294901760
  %v774 = vsub.f32 %v666, %v773
  %v775 = vand.u32 %v774, 4294901760
  %v776 = vsub.f32 %v774, %v775
  %v777 = vand.u32 %v776, 4294901760
  %778 = vmatpush1.msra.mxu0 %v777
  %779 = vmatprep.subr.mxu0 0.0
  %v780 = vand.u32 %v667, 4294901760
  %v781 = vsub.f32 %v667, %v780
  %v782 = vand.u32 %v781, 4294901760
  %v783 = vsub.f32 %v781, %v782
  %v784 = vand.u32 %v783, 4294901760
  %785 = vmatpush1.msra.mxu0 %v784
  %786 = vmatprep.subr.mxu0 0.0
  %787 = vmatpush1.msra.mxu0 0.0
  %788 = vmatprep.subr.mxu0 0.0
  %789 = vmatpush1.msra.mxu0 0.0
  %790 = vmatprep.subr.mxu0 0.0
  %791 = vmatpush1.msra.mxu0 0.0
  %792 = vmatprep.subr.mxu0 0.0
  %793 = vmatpush1.msra.mxu0 0.0
  %794 = vmatprep.subr.mxu0 0.0
  %795 = vmatpush1.msra.mxu0 0.0
  %796 = vmatprep.subr.mxu0 0.0
  %797 = vmatpush1.msra.mxu0 0.0
  %798 = vmatprep.subr.mxu0 0.0
  %799 = vmatpush1.msra.mxu0 0.0
  %800 = vmatprep.subr.mxu0 0.0
  %801 = vmatpush1.msra.mxu0 0.0
  %802 = vmatprep.subr.mxu0 0.0
  %803 = vmatpush1.msra.mxu0 0.0
  %804 = vmatprep.subr.mxu0 0.0
  %805 = vmatpush1.msra.mxu0 0.0
  %806 = vmatprep.subr.mxu0 0.0
  %807 = vmatpush1.msra.mxu0 0.0
  %808 = vmatprep.subr.mxu0 0.0
  %809 = vmatpush1.msra.mxu0 0.0
  %810 = vmatprep.subr.mxu0 0.0
  %811 = vmatpush1.msra.mxu0 0.0
  %812 = vmatprep.subr.mxu0 0.0
  %813 = vmatpush1.msra.mxu0 0.0
  %814 = vmatprep.subr.mxu0 0.0
  %815 = vmatpush1.msra.mxu0 0.0
  %816 = vmatprep.subr.mxu0 0.0
  %817 = vmatpush1.msra.mxu0 0.0
  %818 = vmatprep.subr.mxu0 0.0
  %819 = vmatpush1.msra.mxu0 0.0
  %820 = vmatprep.subr.mxu0 0.0
  %821 = vmatpush1.msra.mxu0 0.0
  %822 = vmatprep.subr.mxu0 0.0
  %823 = vmatpush1.msra.mxu0 0.0
  %824 = vmatprep.subr.mxu0 0.0
  %825 = vmatpush1.msra.mxu0 0.0
  %826 = vmatprep.subr.mxu0 0.0
  %827 = vmatpush1.msra.mxu0 0.0
  %828 = vmatprep.subr.mxu0 0.0
  %829 = vmatpush1.msra.mxu0 0.0
  %830 = vmatprep.subr.mxu0 0.0
  %831 = vmatpush1.msra.mxu0 0.0
  %832 = vmatprep.subr.mxu0 0.0
  %833 = vmatpush1.msra.mxu0 0.0
  %834 = vmatprep.subr.mxu0 0.0
  %835 = vmatpush1.msra.mxu0 0.0
  %836 = vmatprep.subr.mxu0 0.0
  %837 = vmatpush1.msra.mxu0 0.0
  %838 = vmatprep.subr.mxu0 0.0
  %839 = vmatpush1.msra.mxu0 0.0
  %840 = vmatprep.subr.mxu0 0.0
  %841 = vmatpush1.msra.mxu0 0.0
  %842 = vmatprep.mubr.f32.mxu0 0.0
  %v843 = vand.u32 %v677, 4294901760
  %844 = vmatmul.mubr.f32.gmra.mrb[0].mxu0 %v843
  %v845 = vpop.f32.mrb[0].mxu0
  %v846 = vadd.f32 %v755, %v845
  %v847 = vpop.f32.mrb[0].mxu0
  %848 = vdwg.mxu0
  %849 = vmatprep.subr.mxu0 0.0
  %v850 = vand.u32 %v664, 4294901760
  %v851 = vsub.f32 %v664, %v850
  %852 = vmatpush1.msra.mxu0 %v851
  %853 = vmatprep.subr.mxu0 0.0
  %v854 = vand.u32 %v665, 4294901760
  %v855 = vsub.f32 %v665, %v854
  %856 = vmatpush1.msra.mxu0 %v855
  %857 = vmatprep.subr.mxu0 0.0
  %v858 = vand.u32 %v666, 4294901760
  %v859 = vsub.f32 %v666, %v858
  %860 = vmatpush1.msra.mxu0 %v859
  %861 = vmatprep.subr.mxu0 0.0
  %v862 = vand.u32 %v667, 4294901760
  %v863 = vsub.f32 %v667, %v862
  %864 = vmatpush1.msra.mxu0 %v863
  %865 = vmatprep.subr.mxu0 0.0
  %866 = vmatpush1.msra.mxu0 0.0
  %867 = vmatprep.subr.mxu0 0.0
  %868 = vmatpush1.msra.mxu0 0.0
  %869 = vmatprep.subr.mxu0 0.0
  %870 = vmatpush1.msra.mxu0 0.0
  %871 = vmatprep.subr.mxu0 0.0
  %872 = vmatpush1.msra.mxu0 0.0
  %873 = vmatprep.subr.mxu0 0.0
  %874 = vmatpush1.msra.mxu0 0.0
  %875 = vmatprep.subr.mxu0 0.0
  %876 = vmatpush1.msra.mxu0 0.0
  %877 = vmatprep.subr.mxu0 0.0
  %878 = vmatpush1.msra.mxu0 0.0
  %879 = vmatprep.subr.mxu0 0.0
  %880 = vmatpush1.msra.mxu0 0.0
  %881 = vmatprep.subr.mxu0 0.0
  %882 = vmatpush1.msra.mxu0 0.0
  %883 = vmatprep.subr.mxu0 0.0
  %884 = vmatpush1.msra.mxu0 0.0
  %885 = vmatprep.subr.mxu0 0.0
  %886 = vmatpush1.msra.mxu0 0.0
  %887 = vmatprep.subr.mxu0 0.0
  %888 = vmatpush1.msra.mxu0 0.0
  %889 = vmatprep.subr.mxu0 0.0
  %890 = vmatpush1.msra.mxu0 0.0
  %891 = vmatprep.subr.mxu0 0.0
  %892 = vmatpush1.msra.mxu0 0.0
  %893 = vmatprep.subr.mxu0 0.0
  %894 = vmatpush1.msra.mxu0 0.0
  %895 = vmatprep.subr.mxu0 0.0
  %896 = vmatpush1.msra.mxu0 0.0
  %897 = vmatprep.subr.mxu0 0.0
  %898 = vmatpush1.msra.mxu0 0.0
  %899 = vmatprep.subr.mxu0 0.0
  %900 = vmatpush1.msra.mxu0 0.0
  %901 = vmatprep.subr.mxu0 0.0
  %902 = vmatpush1.msra.mxu0 0.0
  %903 = vmatprep.subr.mxu0 0.0
  %904 = vmatpush1.msra.mxu0 0.0
  %905 = vmatprep.subr.mxu0 0.0
  %906 = vmatpush1.msra.mxu0 0.0
  %907 = vmatprep.subr.mxu0 0.0
  %908 = vmatpush1.msra.mxu0 0.0
  %909 = vmatprep.subr.mxu0 0.0
  %910 = vmatpush1.msra.mxu0 0.0
  %911 = vmatprep.subr.mxu0 0.0
  %912 = vmatpush1.msra.mxu0 0.0
  %913 = vmatprep.subr.mxu0 0.0
  %914 = vmatpush1.msra.mxu0 0.0
  %915 = vmatprep.subr.mxu0 0.0
  %916 = vmatpush1.msra.mxu0 0.0
  %917 = vmatprep.subr.mxu0 0.0
  %918 = vmatpush1.msra.mxu0 0.0
  %919 = vmatprep.subr.mxu0 0.0
  %920 = vmatpush1.msra.mxu0 0.0
  %921 = vmatprep.mubr.f32.mxu0 0.0
  %v922 = vand.u32 %v677, 4294901760
  %v923 = vsub.f32 %v677, %v922
  %924 = vmatmul.mubr.f32.gmra.mrb[0].mxu0 %v923
  %v925 = vpop.f32.mrb[0].mxu0
  %v926 = vadd.f32 %v846, %v925
  %v927 = vpop.f32.mrb[0].mxu0
  %928 = vdwg.mxu0
  %929 = vmatprep.subr.mxu0 0.0
  %v930 = vand.u32 %v664, 4294901760
  %931 = vmatpush1.msra.mxu0 %v930
  %932 = vmatprep.subr.mxu0 0.0
  %v933 = vand.u32 %v665, 4294901760
  %934 = vmatpush1.msra.mxu0 %v933
  %935 = vmatprep.subr.mxu0 0.0
  %v936 = vand.u32 %v666, 4294901760
  %937 = vmatpush1.msra.mxu0 %v936
  %938 = vmatprep.subr.mxu0 0.0
  %v939 = vand.u32 %v667, 4294901760
  %940 = vmatpush1.msra.mxu0 %v939
  %941 = vmatprep.subr.mxu0 0.0
  %942 = vmatpush1.msra.mxu0 0.0
  %943 = vmatprep.subr.mxu0 0.0
  %944 = vmatpush1.msra.mxu0 0.0
  %945 = vmatprep.subr.mxu0 0.0
  %946 = vmatpush1.msra.mxu0 0.0
  %947 = vmatprep.subr.mxu0 0.0
  %948 = vmatpush1.msra.mxu0 0.0
  %949 = vmatprep.subr.mxu0 0.0
  %950 = vmatpush1.msra.mxu0 0.0
  %951 = vmatprep.subr.mxu0 0.0
  %952 = vmatpush1.msra.mxu0 0.0
  %953 = vmatprep.subr.mxu0 0.0
  %954 = vmatpush1.msra.mxu0 0.0
  %955 = vmatprep.subr.mxu0 0.0
  %956 = vmatpush1.msra.mxu0 0.0
  %957 = vmatprep.subr.mxu0 0.0
  %958 = vmatpush1.msra.mxu0 0.0
  %959 = vmatprep.subr.mxu0 0.0
  %960 = vmatpush1.msra.mxu0 0.0
  %961 = vmatprep.subr.mxu0 0.0
  %962 = vmatpush1.msra.mxu0 0.0
  %963 = vmatprep.subr.mxu0 0.0
  %964 = vmatpush1.msra.mxu0 0.0
  %965 = vmatprep.subr.mxu0 0.0
  %966 = vmatpush1.msra.mxu0 0.0
  %967 = vmatprep.subr.mxu0 0.0
  %968 = vmatpush1.msra.mxu0 0.0
  %969 = vmatprep.subr.mxu0 0.0
  %970 = vmatpush1.msra.mxu0 0.0
  %971 = vmatprep.subr.mxu0 0.0
  %972 = vmatpush1.msra.mxu0 0.0
  %973 = vmatprep.subr.mxu0 0.0
  %974 = vmatpush1.msra.mxu0 0.0
  %975 = vmatprep.subr.mxu0 0.0
  %976 = vmatpush1.msra.mxu0 0.0
  %977 = vmatprep.subr.mxu0 0.0
  %978 = vmatpush1.msra.mxu0 0.0
  %979 = vmatprep.subr.mxu0 0.0
  %980 = vmatpush1.msra.mxu0 0.0
  %981 = vmatprep.subr.mxu0 0.0
  %982 = vmatpush1.msra.mxu0 0.0
  %983 = vmatprep.subr.mxu0 0.0
  %984 = vmatpush1.msra.mxu0 0.0
  %985 = vmatprep.subr.mxu0 0.0
  %986 = vmatpush1.msra.mxu0 0.0
  %987 = vmatprep.subr.mxu0 0.0
  %988 = vmatpush1.msra.mxu0 0.0
  %989 = vmatprep.subr.mxu0 0.0
  %990 = vmatpush1.msra.mxu0 0.0
  %991 = vmatprep.subr.mxu0 0.0
  %992 = vmatpush1.msra.mxu0 0.0
  %993 = vmatprep.subr.mxu0 0.0
  %994 = vmatpush1.msra.mxu0 0.0
  %995 = vmatprep.subr.mxu0 0.0
  %996 = vmatpush1.msra.mxu0 0.0
  %997 = vmatprep.mubr.f32.mxu0 0.0
  %v998 = vand.u32 %v677, 4294901760
  %v999 = vsub.f32 %v677, %v998
  %v1000 = vand.u32 %v999, 4294901760
  %1001 = vmatmul.mubr.f32.gmra.mrb[0].mxu0 %v1000
  %v1002 = vpop.f32.mrb[0].mxu0
  %v1003 = vadd.f32 %v926, %v1002
  %v1004 = vpop.f32.mrb[0].mxu0
  %1005 = vdwg.mxu0
  %1006 = vmatprep.subr.mxu0 0.0
  %v1007 = vand.u32 %v664, 4294901760
  %v1008 = vsub.f32 %v664, %v1007
  %v1009 = vand.u32 %v1008, 4294901760
  %1010 = vmatpush1.msra.mxu0 %v1009
  %1011 = vmatprep.subr.mxu0 0.0
  %v1012 = vand.u32 %v665, 4294901760
  %v1013 = vsub.f32 %v665, %v1012
  %v1014 = vand.u32 %v1013, 4294901760
  %1015 = vmatpush1.msra.mxu0 %v1014
  %1016 = vmatprep.subr.mxu0 0.0
  %v1017 = vand.u32 %v666, 4294901760
  %v1018 = vsub.f32 %v666, %v1017
  %v1019 = vand.u32 %v1018, 4294901760
  %1020 = vmatpush1.msra.mxu0 %v1019
  %1021 = vmatprep.subr.mxu0 0.0
  %v1022 = vand.u32 %v667, 4294901760
  %v1023 = vsub.f32 %v667, %v1022
  %v1024 = vand.u32 %v1023, 4294901760
  %1025 = vmatpush1.msra.mxu0 %v1024
  %1026 = vmatprep.subr.mxu0 0.0
  %1027 = vmatpush1.msra.mxu0 0.0
  %1028 = vmatprep.subr.mxu0 0.0
  %1029 = vmatpush1.msra.mxu0 0.0
  %1030 = vmatprep.subr.mxu0 0.0
  %1031 = vmatpush1.msra.mxu0 0.0
  %1032 = vmatprep.subr.mxu0 0.0
  %1033 = vmatpush1.msra.mxu0 0.0
  %1034 = vmatprep.subr.mxu0 0.0
  %1035 = vmatpush1.msra.mxu0 0.0
  %1036 = vmatprep.subr.mxu0 0.0
  %1037 = vmatpush1.msra.mxu0 0.0
  %1038 = vmatprep.subr.mxu0 0.0
  %1039 = vmatpush1.msra.mxu0 0.0
  %1040 = vmatprep.subr.mxu0 0.0
  %1041 = vmatpush1.msra.mxu0 0.0
  %1042 = vmatprep.subr.mxu0 0.0
  %1043 = vmatpush1.msra.mxu0 0.0
  %1044 = vmatprep.subr.mxu0 0.0
  %1045 = vmatpush1.msra.mxu0 0.0
  %1046 = vmatprep.subr.mxu0 0.0
  %1047 = vmatpush1.msra.mxu0 0.0
  %1048 = vmatprep.subr.mxu0 0.0
  %1049 = vmatpush1.msra.mxu0 0.0
  %1050 = vmatprep.subr.mxu0 0.0
  %1051 = vmatpush1.msra.mxu0 0.0
  %1052 = vmatprep.subr.mxu0 0.0
  %1053 = vmatpush1.msra.mxu0 0.0
  %1054 = vmatprep.subr.mxu0 0.0
  %1055 = vmatpush1.msra.mxu0 0.0
  %1056 = vmatprep.subr.mxu0 0.0
  %1057 = vmatpush1.msra.mxu0 0.0
  %1058 = vmatprep.subr.mxu0 0.0
  %1059 = vmatpush1.msra.mxu0 0.0
  %1060 = vmatprep.subr.mxu0 0.0
  %1061 = vmatpush1.msra.mxu0 0.0
  %1062 = vmatprep.subr.mxu0 0.0
  %1063 = vmatpush1.msra.mxu0 0.0
  %1064 = vmatprep.subr.mxu0 0.0
  %1065 = vmatpush1.msra.mxu0 0.0
  %1066 = vmatprep.subr.mxu0 0.0
  %1067 = vmatpush1.msra.mxu0 0.0
  %1068 = vmatprep.subr.mxu0 0.0
  %1069 = vmatpush1.msra.mxu0 0.0
  %1070 = vmatprep.subr.mxu0 0.0
  %1071 = vmatpush1.msra.mxu0 0.0
  %1072 = vmatprep.subr.mxu0 0.0
  %1073 = vmatpush1.msra.mxu0 0.0
  %1074 = vmatprep.subr.mxu0 0.0
  %1075 = vmatpush1.msra.mxu0 0.0
  %1076 = vmatprep.subr.mxu0 0.0
  %1077 = vmatpush1.msra.mxu0 0.0
  %1078 = vmatprep.subr.mxu0 0.0
  %1079 = vmatpush1.msra.mxu0 0.0
  %1080 = vmatprep.subr.mxu0 0.0
  %1081 = vmatpush1.msra.mxu0 0.0
  %1082 = vmatprep.mubr.f32.mxu0 0.0
  %v1083 = vand.u32 %v677, 4294901760
  %1084 = vmatmul.mubr.f32.gmra.mrb[0].mxu0 %v1083
  %v1085 = vpop.f32.mrb[0].mxu0
  %v1086 = vadd.f32 %v1003, %v1085
  %v1087 = vpop.f32.mrb[0].mxu0
  %1088 = vdwg.mxu0
  %1089 = vmatprep.subr.mxu0 0.0
  %v1090 = vand.u32 %v664, 4294901760
  %1091 = vmatpush1.msra.mxu0 %v1090
  %1092 = vmatprep.subr.mxu0 0.0
  %v1093 = vand.u32 %v665, 4294901760
  %1094 = vmatpush1.msra.mxu0 %v1093
  %1095 = vmatprep.subr.mxu0 0.0
  %v1096 = vand.u32 %v666, 4294901760
  %1097 = vmatpush1.msra.mxu0 %v1096
  %1098 = vmatprep.subr.mxu0 0.0
  %v1099 = vand.u32 %v667, 4294901760
  %1100 = vmatpush1.msra.mxu0 %v1099
  %1101 = vmatprep.subr.mxu0 0.0
  %1102 = vmatpush1.msra.mxu0 0.0
  %1103 = vmatprep.subr.mxu0 0.0
  %1104 = vmatpush1.msra.mxu0 0.0
  %1105 = vmatprep.subr.mxu0 0.0
  %1106 = vmatpush1.msra.mxu0 0.0
  %1107 = vmatprep.subr.mxu0 0.0
  %1108 = vmatpush1.msra.mxu0 0.0
  %1109 = vmatprep.subr.mxu0 0.0
  %1110 = vmatpush1.msra.mxu0 0.0
  %1111 = vmatprep.subr.mxu0 0.0
  %1112 = vmatpush1.msra.mxu0 0.0
  %1113 = vmatprep.subr.mxu0 0.0
  %1114 = vmatpush1.msra.mxu0 0.0
  %1115 = vmatprep.subr.mxu0 0.0
  %1116 = vmatpush1.msra.mxu0 0.0
  %1117 = vmatprep.subr.mxu0 0.0
  %1118 = vmatpush1.msra.mxu0 0.0
  %1119 = vmatprep.subr.mxu0 0.0
  %1120 = vmatpush1.msra.mxu0 0.0
  %1121 = vmatprep.subr.mxu0 0.0
  %1122 = vmatpush1.msra.mxu0 0.0
  %1123 = vmatprep.subr.mxu0 0.0
  %1124 = vmatpush1.msra.mxu0 0.0
  %1125 = vmatprep.subr.mxu0 0.0
  %1126 = vmatpush1.msra.mxu0 0.0
  %1127 = vmatprep.subr.mxu0 0.0
  %1128 = vmatpush1.msra.mxu0 0.0
  %1129 = vmatprep.subr.mxu0 0.0
  %1130 = vmatpush1.msra.mxu0 0.0
  %1131 = vmatprep.subr.mxu0 0.0
  %1132 = vmatpush1.msra.mxu0 0.0
  %1133 = vmatprep.subr.mxu0 0.0
  %1134 = vmatpush1.msra.mxu0 0.0
  %1135 = vmatprep.subr.mxu0 0.0
  %1136 = vmatpush1.msra.mxu0 0.0
  %1137 = vmatprep.subr.mxu0 0.0
  %1138 = vmatpush1.msra.mxu0 0.0
  %1139 = vmatprep.subr.mxu0 0.0
  %1140 = vmatpush1.msra.mxu0 0.0
  %1141 = vmatprep.subr.mxu0 0.0
  %1142 = vmatpush1.msra.mxu0 0.0
  %1143 = vmatprep.subr.mxu0 0.0
  %1144 = vmatpush1.msra.mxu0 0.0
  %1145 = vmatprep.subr.mxu0 0.0
  %1146 = vmatpush1.msra.mxu0 0.0
  %1147 = vmatprep.subr.mxu0 0.0
  %1148 = vmatpush1.msra.mxu0 0.0
  %1149 = vmatprep.subr.mxu0 0.0
  %1150 = vmatpush1.msra.mxu0 0.0
  %1151 = vmatprep.subr.mxu0 0.0
  %1152 = vmatpush1.msra.mxu0 0.0
  %1153 = vmatprep.subr.mxu0 0.0
  %1154 = vmatpush1.msra.mxu0 0.0
  %1155 = vmatprep.subr.mxu0 0.0
  %1156 = vmatpush1.msra.mxu0 0.0
  %1157 = vmatprep.mubr.f32.mxu0 0.0
  %v1158 = vand.u32 %v677, 4294901760
  %1159 = vmatmul.mubr.f32.gmra.mrb[0].mxu0 %v1158
  %v1160 = vpop.f32.mrb[0].mxu0
  %v1161 = vadd.f32 %v1086, %v1160
  %v1162 = vpop.f32.mrb[0].mxu0
  %1163 = vdwg.mxu0
  %v1164 = vmax.f32 %v1161, 0.0
  %v1165 = vld [vmem:[%s5] sm:$0xff]
  %v1166 = vld [vmem:[%s6] sm:$0x1]
  %v1168 = vlaneseq
  %v1169 = vshrl.u32 %v1168, 7
  %v1170 = vsub.s32 0, %v1169
  %v1171 = vrot.slane %v1166, %v1170
  %vm1173 = vcmask 64512
  %v1175 = vsel %vm1173, %v1164, 0
  %1177 = vmatprep.subr.mxu0 0.0
  %v1178 = vand.u32 %v1165, 4294901760
  %1179 = vmatpush1.msra.mxu0 %v1178
  %1180 = vmatprep.subr.mxu0 0.0
  %1181 = vmatpush1.msra.mxu0 0.0
  %1182 = vmatprep.subr.mxu0 0.0
  %1183 = vmatpush1.msra.mxu0 0.0
  %1184 = vmatprep.subr.mxu0 0.0
  %1185 = vmatpush1.msra.mxu0 0.0
  %1186 = vmatprep.subr.mxu0 0.0
  %1187 = vmatpush1.msra.mxu0 0.0
  %1188 = vmatprep.subr.mxu0 0.0
  %1189 = vmatpush1.msra.mxu0 0.0
  %1190 = vmatprep.subr.mxu0 0.0
  %1191 = vmatpush1.msra.mxu0 0.0
  %1192 = vmatprep.subr.mxu0 0.0
  %1193 = vmatpush1.msra.mxu0 0.0
  %1194 = vmatprep.subr.mxu0 0.0
  %1195 = vmatpush1.msra.mxu0 0.0
  %1196 = vmatprep.subr.mxu0 0.0
  %1197 = vmatpush1.msra.mxu0 0.0
  %1198 = vmatprep.subr.mxu0 0.0
  %1199 = vmatpush1.msra.mxu0 0.0
  %1200 = vmatprep.subr.mxu0 0.0
  %1201 = vmatpush1.msra.mxu0 0.0
  %1202 = vmatprep.subr.mxu0 0.0
  %1203 = vmatpush1.msra.mxu0 0.0
  %1204 = vmatprep.subr.mxu0 0.0
  %1205 = vmatpush1.msra.mxu0 0.0
  %1206 = vmatprep.subr.mxu0 0.0
  %1207 = vmatpush1.msra.mxu0 0.0
  %1208 = vmatprep.subr.mxu0 0.0
  %1209 = vmatpush1.msra.mxu0 0.0
  %1210 = vmatprep.subr.mxu0 0.0
  %1211 = vmatpush1.msra.mxu0 0.0
  %1212 = vmatprep.subr.mxu0 0.0
  %1213 = vmatpush1.msra.mxu0 0.0
  %1214 = vmatprep.subr.mxu0 0.0
  %1215 = vmatpush1.msra.mxu0 0.0
  %1216 = vmatprep.subr.mxu0 0.0
  %1217 = vmatpush1.msra.mxu0 0.0
  %1218 = vmatprep.subr.mxu0 0.0
  %1219 = vmatpush1.msra.mxu0 0.0
  %1220 = vmatprep.subr.mxu0 0.0
  %1221 = vmatpush1.msra.mxu0 0.0
  %1222 = vmatprep.subr.mxu0 0.0
  %1223 = vmatpush1.msra.mxu0 0.0
  %1224 = vmatprep.subr.mxu0 0.0
  %1225 = vmatpush1.msra.mxu0 0.0
  %1226 = vmatprep.subr.mxu0 0.0
  %1227 = vmatpush1.msra.mxu0 0.0
  %1228 = vmatprep.subr.mxu0 0.0
  %1229 = vmatpush1.msra.mxu0 0.0
  %1230 = vmatprep.subr.mxu0 0.0
  %1231 = vmatpush1.msra.mxu0 0.0
  %1232 = vmatprep.subr.mxu0 0.0
  %1233 = vmatpush1.msra.mxu0 0.0
  %1234 = vmatprep.subr.mxu0 0.0
  %1235 = vmatpush1.msra.mxu0 0.0
  %1236 = vmatprep.subr.mxu0 0.0
  %1237 = vmatpush1.msra.mxu0 0.0
  %1238 = vmatprep.subr.mxu0 0.0
  %1239 = vmatpush1.msra.mxu0 0.0
  %1240 = vmatprep.subr.mxu0 0.0
  %1241 = vmatpush1.msra.mxu0 0.0
  %1242 = vmatprep.mubr.f32.mxu0 0.0
  %v1243 = vand.u32 %v1175, 4294901760
  %v1244 = vsub.f32 %v1175, %v1243
  %v1245 = vand.u32 %v1244, 4294901760
  %v1246 = vsub.f32 %v1244, %v1245
  %v1247 = vand.u32 %v1246, 4294901760
  %1248 = vmatmul.mubr.f32.gmra.mrb[0].mxu0 %v1247
  %v1249 = vpop.f32.mrb[0].mxu0
  %v1250 = vadd.f32 %v1171, %v1249
  %v1251 = vpop.f32.mrb[0].mxu0
  %1252 = vdwg.mxu0
  %1253 = vmatprep.subr.mxu0 0.0
  %v1254 = vand.u32 %v1165, 4294901760
  %v1255 = vsub.f32 %v1165, %v1254
  %v1256 = vand.u32 %v1255, 4294901760
  %v1257 = vsub.f32 %v1255, %v1256
  %v1258 = vand.u32 %v1257, 4294901760
  %1259 = vmatpush1.msra.mxu0 %v1258
  %1260 = vmatprep.subr.mxu0 0.0
  %1261 = vmatpush1.msra.mxu0 0.0
  %1262 = vmatprep.subr.mxu0 0.0
  %1263 = vmatpush1.msra.mxu0 0.0
  %1264 = vmatprep.subr.mxu0 0.0
  %1265 = vmatpush1.msra.mxu0 0.0
  %1266 = vmatprep.subr.mxu0 0.0
  %1267 = vmatpush1.msra.mxu0 0.0
  %1268 = vmatprep.subr.mxu0 0.0
  %1269 = vmatpush1.msra.mxu0 0.0
  %1270 = vmatprep.subr.mxu0 0.0
  %1271 = vmatpush1.msra.mxu0 0.0
  %1272 = vmatprep.subr.mxu0 0.0
  %1273 = vmatpush1.msra.mxu0 0.0
  %1274 = vmatprep.subr.mxu0 0.0
  %1275 = vmatpush1.msra.mxu0 0.0
  %1276 = vmatprep.subr.mxu0 0.0
  %1277 = vmatpush1.msra.mxu0 0.0
  %1278 = vmatprep.subr.mxu0 0.0
  %1279 = vmatpush1.msra.mxu0 0.0
  %1280 = vmatprep.subr.mxu0 0.0
  %1281 = vmatpush1.msra.mxu0 0.0
  %1282 = vmatprep.subr.mxu0 0.0
  %1283 = vmatpush1.msra.mxu0 0.0
  %1284 = vmatprep.subr.mxu0 0.0
  %1285 = vmatpush1.msra.mxu0 0.0
  %1286 = vmatprep.subr.mxu0 0.0
  %1287 = vmatpush1.msra.mxu0 0.0
  %1288 = vmatprep.subr.mxu0 0.0
  %1289 = vmatpush1.msra.mxu0 0.0
  %1290 = vmatprep.subr.mxu0 0.0
  %1291 = vmatpush1.msra.mxu0 0.0
  %1292 = vmatprep.subr.mxu0 0.0
  %1293 = vmatpush1.msra.mxu0 0.0
  %1294 = vmatprep.subr.mxu0 0.0
  %1295 = vmatpush1.msra.mxu0 0.0
  %1296 = vmatprep.subr.mxu0 0.0
  %1297 = vmatpush1.msra.mxu0 0.0
  %1298 = vmatprep.subr.mxu0 0.0
  %1299 = vmatpush1.msra.mxu0 0.0
  %1300 = vmatprep.subr.mxu0 0.0
  %1301 = vmatpush1.msra.mxu0 0.0
  %1302 = vmatprep.subr.mxu0 0.0
  %1303 = vmatpush1.msra.mxu0 0.0
  %1304 = vmatprep.subr.mxu0 0.0
  %1305 = vmatpush1.msra.mxu0 0.0
  %1306 = vmatprep.subr.mxu0 0.0
  %1307 = vmatpush1.msra.mxu0 0.0
  %1308 = vmatprep.subr.mxu0 0.0
  %1309 = vmatpush1.msra.mxu0 0.0
  %1310 = vmatprep.subr.mxu0 0.0
  %1311 = vmatpush1.msra.mxu0 0.0
  %1312 = vmatprep.subr.mxu0 0.0
  %1313 = vmatpush1.msra.mxu0 0.0
  %1314 = vmatprep.subr.mxu0 0.0
  %1315 = vmatpush1.msra.mxu0 0.0
  %1316 = vmatprep.subr.mxu0 0.0
  %1317 = vmatpush1.msra.mxu0 0.0
  %1318 = vmatprep.subr.mxu0 0.0
  %1319 = vmatpush1.msra.mxu0 0.0
  %1320 = vmatprep.subr.mxu0 0.0
  %1321 = vmatpush1.msra.mxu0 0.0
  %1322 = vmatprep.mubr.f32.mxu0 0.0
  %v1323 = vand.u32 %v1175, 4294901760
  %1324 = vmatmul.mubr.f32.gmra.mrb[0].mxu0 %v1323
  %v1325 = vpop.f32.mrb[0].mxu0
  %v1326 = vadd.f32 %v1250, %v1325
  %v1327 = vpop.f32.mrb[0].mxu0
  %1328 = vdwg.mxu0
  %1329 = vmatprep.subr.mxu0 0.0
  %v1330 = vand.u32 %v1165, 4294901760
  %v1331 = vsub.f32 %v1165, %v1330
  %1332 = vmatpush1.msra.mxu0 %v1331
  %1333 = vmatprep.subr.mxu0 0.0
  %1334 = vmatpush1.msra.mxu0 0.0
  %1335 = vmatprep.subr.mxu0 0.0
  %1336 = vmatpush1.msra.mxu0 0.0
  %1337 = vmatprep.subr.mxu0 0.0
  %1338 = vmatpush1.msra.mxu0 0.0
  %1339 = vmatprep.subr.mxu0 0.0
  %1340 = vmatpush1.msra.mxu0 0.0
  %1341 = vmatprep.subr.mxu0 0.0
  %1342 = vmatpush1.msra.mxu0 0.0
  %1343 = vmatprep.subr.mxu0 0.0
  %1344 = vmatpush1.msra.mxu0 0.0
  %1345 = vmatprep.subr.mxu0 0.0
  %1346 = vmatpush1.msra.mxu0 0.0
  %1347 = vmatprep.subr.mxu0 0.0
  %1348 = vmatpush1.msra.mxu0 0.0
  %1349 = vmatprep.subr.mxu0 0.0
  %1350 = vmatpush1.msra.mxu0 0.0
  %1351 = vmatprep.subr.mxu0 0.0
  %1352 = vmatpush1.msra.mxu0 0.0
  %1353 = vmatprep.subr.mxu0 0.0
  %1354 = vmatpush1.msra.mxu0 0.0
  %1355 = vmatprep.subr.mxu0 0.0
  %1356 = vmatpush1.msra.mxu0 0.0
  %1357 = vmatprep.subr.mxu0 0.0
  %1358 = vmatpush1.msra.mxu0 0.0
  %1359 = vmatprep.subr.mxu0 0.0
  %1360 = vmatpush1.msra.mxu0 0.0
  %1361 = vmatprep.subr.mxu0 0.0
  %1362 = vmatpush1.msra.mxu0 0.0
  %1363 = vmatprep.subr.mxu0 0.0
  %1364 = vmatpush1.msra.mxu0 0.0
  %1365 = vmatprep.subr.mxu0 0.0
  %1366 = vmatpush1.msra.mxu0 0.0
  %1367 = vmatprep.subr.mxu0 0.0
  %1368 = vmatpush1.msra.mxu0 0.0
  %1369 = vmatprep.subr.mxu0 0.0
  %1370 = vmatpush1.msra.mxu0 0.0
  %1371 = vmatprep.subr.mxu0 0.0
  %1372 = vmatpush1.msra.mxu0 0.0
  %1373 = vmatprep.subr.mxu0 0.0
  %1374 = vmatpush1.msra.mxu0 0.0
  %1375 = vmatprep.subr.mxu0 0.0
  %1376 = vmatpush1.msra.mxu0 0.0
  %1377 = vmatprep.subr.mxu0 0.0
  %1378 = vmatpush1.msra.mxu0 0.0
  %1379 = vmatprep.subr.mxu0 0.0
  %1380 = vmatpush1.msra.mxu0 0.0
  %1381 = vmatprep.subr.mxu0 0.0
  %1382 = vmatpush1.msra.mxu0 0.0
  %1383 = vmatprep.subr.mxu0 0.0
  %1384 = vmatpush1.msra.mxu0 0.0
  %1385 = vmatprep.subr.mxu0 0.0
  %1386 = vmatpush1.msra.mxu0 0.0
  %1387 = vmatprep.subr.mxu0 0.0
  %1388 = vmatpush1.msra.mxu0 0.0
  %1389 = vmatprep.subr.mxu0 0.0
  %1390 = vmatpush1.msra.mxu0 0.0
  %1391 = vmatprep.subr.mxu0 0.0
  %1392 = vmatpush1.msra.mxu0 0.0
  %1393 = vmatprep.subr.mxu0 0.0
  %1394 = vmatpush1.msra.mxu0 0.0
  %1395 = vmatprep.mubr.f32.mxu0 0.0
  %v1396 = vand.u32 %v1175, 4294901760
  %v1397 = vsub.f32 %v1175, %v1396
  %1398 = vmatmul.mubr.f32.gmra.mrb[0].mxu0 %v1397
  %v1399 = vpop.f32.mrb[0].mxu0
  %v1400 = vadd.f32 %v1326, %v1399
  %v1401 = vpop.f32.mrb[0].mxu0
  %1402 = vdwg.mxu0
  %1403 = vmatprep.subr.mxu0 0.0
  %v1404 = vand.u32 %v1165, 4294901760
  %1405 = vmatpush1.msra.mxu0 %v1404
  %1406 = vmatprep.subr.mxu0 0.0
  %1407 = vmatpush1.msra.mxu0 0.0
  %1408 = vmatprep.subr.mxu0 0.0
  %1409 = vmatpush1.msra.mxu0 0.0
  %1410 = vmatprep.subr.mxu0 0.0
  %1411 = vmatpush1.msra.mxu0 0.0
  %1412 = vmatprep.subr.mxu0 0.0
  %1413 = vmatpush1.msra.mxu0 0.0
  %1414 = vmatprep.subr.mxu0 0.0
  %1415 = vmatpush1.msra.mxu0 0.0
  %1416 = vmatprep.subr.mxu0 0.0
  %1417 = vmatpush1.msra.mxu0 0.0
  %1418 = vmatprep.subr.mxu0 0.0
  %1419 = vmatpush1.msra.mxu0 0.0
  %1420 = vmatprep.subr.mxu0 0.0
  %1421 = vmatpush1.msra.mxu0 0.0
  %1422 = vmatprep.subr.mxu0 0.0
  %1423 = vmatpush1.msra.mxu0 0.0
  %1424 = vmatprep.subr.mxu0 0.0
  %1425 = vmatpush1.msra.mxu0 0.0
  %1426 = vmatprep.subr.mxu0 0.0
  %1427 = vmatpush1.msra.mxu0 0.0
  %1428 = vmatprep.subr.mxu0 0.0
  %1429 = vmatpush1.msra.mxu0 0.0
  %1430 = vmatprep.subr.mxu0 0.0
  %1431 = vmatpush1.msra.mxu0 0.0
  %1432 = vmatprep.subr.mxu0 0.0
  %1433 = vmatpush1.msra.mxu0 0.0
  %1434 = vmatprep.subr.mxu0 0.0
  %1435 = vmatpush1.msra.mxu0 0.0
  %1436 = vmatprep.subr.mxu0 0.0
  %1437 = vmatpush1.msra.mxu0 0.0
  %1438 = vmatprep.subr.mxu0 0.0
  %1439 = vmatpush1.msra.mxu0 0.0
  %1440 = vmatprep.subr.mxu0 0.0
  %1441 = vmatpush1.msra.mxu0 0.0
  %1442 = vmatprep.subr.mxu0 0.0
  %1443 = vmatpush1.msra.mxu0 0.0
  %1444 = vmatprep.subr.mxu0 0.0
  %1445 = vmatpush1.msra.mxu0 0.0
  %1446 = vmatprep.subr.mxu0 0.0
  %1447 = vmatpush1.msra.mxu0 0.0
  %1448 = vmatprep.subr.mxu0 0.0
  %1449 = vmatpush1.msra.mxu0 0.0
  %1450 = vmatprep.subr.mxu0 0.0
  %1451 = vmatpush1.msra.mxu0 0.0
  %1452 = vmatprep.subr.mxu0 0.0
  %1453 = vmatpush1.msra.mxu0 0.0
  %1454 = vmatprep.subr.mxu0 0.0
  %1455 = vmatpush1.msra.mxu0 0.0
  %1456 = vmatprep.subr.mxu0 0.0
  %1457 = vmatpush1.msra.mxu0 0.0
  %1458 = vmatprep.subr.mxu0 0.0
  %1459 = vmatpush1.msra.mxu0 0.0
  %1460 = vmatprep.subr.mxu0 0.0
  %1461 = vmatpush1.msra.mxu0 0.0
  %1462 = vmatprep.subr.mxu0 0.0
  %1463 = vmatpush1.msra.mxu0 0.0
  %1464 = vmatprep.subr.mxu0 0.0
  %1465 = vmatpush1.msra.mxu0 0.0
  %1466 = vmatprep.subr.mxu0 0.0
  %1467 = vmatpush1.msra.mxu0 0.0
  %1468 = vmatprep.mubr.f32.mxu0 0.0
  %v1469 = vand.u32 %v1175, 4294901760
  %v1470 = vsub.f32 %v1175, %v1469
  %v1471 = vand.u32 %v1470, 4294901760
  %1472 = vmatmul.mubr.f32.gmra.mrb[0].mxu0 %v1471
  %v1473 = vpop.f32.mrb[0].mxu0
  %v1474 = vadd.f32 %v1400, %v1473
  %v1475 = vpop.f32.mrb[0].mxu0
  %1476 = vdwg.mxu0
  %1477 = vmatprep.subr.mxu0 0.0
  %v1478 = vand.u32 %v1165, 4294901760
  %v1479 = vsub.f32 %v1165, %v1478
  %v1480 = vand.u32 %v1479, 4294901760
  %1481 = vmatpush1.msra.mxu0 %v1480
  %1482 = vmatprep.subr.mxu0 0.0
  %1483 = vmatpush1.msra.mxu0 0.0
  %1484 = vmatprep.subr.mxu0 0.0
  %1485 = vmatpush1.msra.mxu0 0.0
  %1486 = vmatprep.subr.mxu0 0.0
  %1487 = vmatpush1.msra.mxu0 0.0
  %1488 = vmatprep.subr.mxu0 0.0
  %1489 = vmatpush1.msra.mxu0 0.0
  %1490 = vmatprep.subr.mxu0 0.0
  %1491 = vmatpush1.msra.mxu0 0.0
  %1492 = vmatprep.subr.mxu0 0.0
  %1493 = vmatpush1.msra.mxu0 0.0
  %1494 = vmatprep.subr.mxu0 0.0
  %1495 = vmatpush1.msra.mxu0 0.0
  %1496 = vmatprep.subr.mxu0 0.0
  %1497 = vmatpush1.msra.mxu0 0.0
  %1498 = vmatprep.subr.mxu0 0.0
  %1499 = vmatpush1.msra.mxu0 0.0
  %1500 = vmatprep.subr.mxu0 0.0
  %1501 = vmatpush1.msra.mxu0 0.0
  %1502 = vmatprep.subr.mxu0 0.0
  %1503 = vmatpush1.msra.mxu0 0.0
  %1504 = vmatprep.subr.mxu0 0.0
  %1505 = vmatpush1.msra.mxu0 0.0
  %1506 = vmatprep.subr.mxu0 0.0
  %1507 = vmatpush1.msra.mxu0 0.0
  %1508 = vmatprep.subr.mxu0 0.0
  %1509 = vmatpush1.msra.mxu0 0.0
  %1510 = vmatprep.subr.mxu0 0.0
  %1511 = vmatpush1.msra.mxu0 0.0
  %1512 = vmatprep.subr.mxu0 0.0
  %1513 = vmatpush1.msra.mxu0 0.0
  %1514 = vmatprep.subr.mxu0 0.0
  %1515 = vmatpush1.msra.mxu0 0.0
  %1516 = vmatprep.subr.mxu0 0.0
  %1517 = vmatpush1.msra.mxu0 0.0
  %1518 = vmatprep.subr.mxu0 0.0
  %1519 = vmatpush1.msra.mxu0 0.0
  %1520 = vmatprep.subr.mxu0 0.0
  %1521 = vmatpush1.msra.mxu0 0.0
  %1522 = vmatprep.subr.mxu0 0.0
  %1523 = vmatpush1.msra.mxu0 0.0
  %1524 = vmatprep.subr.mxu0 0.0
  %1525 = vmatpush1.msra.mxu0 0.0
  %1526 = vmatprep.subr.mxu0 0.0
  %1527 = vmatpush1.msra.mxu0 0.0
  %1528 = vmatprep.subr.mxu0 0.0
  %1529 = vmatpush1.msra.mxu0 0.0
  %1530 = vmatprep.subr.mxu0 0.0
  %1531 = vmatpush1.msra.mxu0 0.0
  %1532 = vmatprep.subr.mxu0 0.0
  %1533 = vmatpush1.msra.mxu0 0.0
  %1534 = vmatprep.subr.mxu0 0.0
  %1535 = vmatpush1.msra.mxu0 0.0
  %1536 = vmatprep.subr.mxu0 0.0
  %1537 = vmatpush1.msra.mxu0 0.0
  %1538 = vmatprep.subr.mxu0 0.0
  %1539 = vmatpush1.msra.mxu0 0.0
  %1540 = vmatprep.subr.mxu0 0.0
  %1541 = vmatpush1.msra.mxu0 0.0
  %1542 = vmatprep.subr.mxu0 0.0
  %1543 = vmatpush1.msra.mxu0 0.0
  %1544 = vmatprep.mubr.f32.mxu0 0.0
  %v1545 = vand.u32 %v1175, 4294901760
  %1546 = vmatmul.mubr.f32.gmra.mrb[0].mxu0 %v1545
  %v1547 = vpop.f32.mrb[0].mxu0
  %v1548 = vadd.f32 %v1474, %v1547
  %v1549 = vpop.f32.mrb[0].mxu0
  %1550 = vdwg.mxu0
  %1551 = vmatprep.subr.mxu0 0.0
  %v1552 = vand.u32 %v1165, 4294901760
  %1553 = vmatpush1.msra.mxu0 %v1552
  %1554 = vmatprep.subr.mxu0 0.0
  %1555 = vmatpush1.msra.mxu0 0.0
  %1556 = vmatprep.subr.mxu0 0.0
  %1557 = vmatpush1.msra.mxu0 0.0
  %1558 = vmatprep.subr.mxu0 0.0
  %1559 = vmatpush1.msra.mxu0 0.0
  %1560 = vmatprep.subr.mxu0 0.0
  %1561 = vmatpush1.msra.mxu0 0.0
  %1562 = vmatprep.subr.mxu0 0.0
  %1563 = vmatpush1.msra.mxu0 0.0
  %1564 = vmatprep.subr.mxu0 0.0
  %1565 = vmatpush1.msra.mxu0 0.0
  %1566 = vmatprep.subr.mxu0 0.0
  %1567 = vmatpush1.msra.mxu0 0.0
  %1568 = vmatprep.subr.mxu0 0.0
  %1569 = vmatpush1.msra.mxu0 0.0
  %1570 = vmatprep.subr.mxu0 0.0
  %1571 = vmatpush1.msra.mxu0 0.0
  %1572 = vmatprep.subr.mxu0 0.0
  %1573 = vmatpush1.msra.mxu0 0.0
  %1574 = vmatprep.subr.mxu0 0.0
  %1575 = vmatpush1.msra.mxu0 0.0
  %1576 = vmatprep.subr.mxu0 0.0
  %1577 = vmatpush1.msra.mxu0 0.0
  %1578 = vmatprep.subr.mxu0 0.0
  %1579 = vmatpush1.msra.mxu0 0.0
  %1580 = vmatprep.subr.mxu0 0.0
  %1581 = vmatpush1.msra.mxu0 0.0
  %1582 = vmatprep.subr.mxu0 0.0
  %1583 = vmatpush1.msra.mxu0 0.0
  %1584 = vmatprep.subr.mxu0 0.0
  %1585 = vmatpush1.msra.mxu0 0.0
  %1586 = vmatprep.subr.mxu0 0.0
  %1587 = vmatpush1.msra.mxu0 0.0
  %1588 = vmatprep.subr.mxu0 0.0
  %1589 = vmatpush1.msra.mxu0 0.0
  %1590 = vmatprep.subr.mxu0 0.0
  %1591 = vmatpush1.msra.mxu0 0.0
  %1592 = vmatprep.subr.mxu0 0.0
  %1593 = vmatpush1.msra.mxu0 0.0
  %1594 = vmatprep.subr.mxu0 0.0
  %1595 = vmatpush1.msra.mxu0 0.0
  %1596 = vmatprep.subr.mxu0 0.0
  %1597 = vmatpush1.msra.mxu0 0.0
  %1598 = vmatprep.subr.mxu0 0.0
  %1599 = vmatpush1.msra.mxu0 0.0
  %1600 = vmatprep.subr.mxu0 0.0
  %1601 = vmatpush1.msra.mxu0 0.0
  %1602 = vmatprep.subr.mxu0 0.0
  %1603 = vmatpush1.msra.mxu0 0.0
  %1604 = vmatprep.subr.mxu0 0.0
  %1605 = vmatpush1.msra.mxu0 0.0
  %1606 = vmatprep.subr.mxu0 0.0
  %1607 = vmatpush1.msra.mxu0 0.0
  %1608 = vmatprep.subr.mxu0 0.0
  %1609 = vmatpush1.msra.mxu0 0.0
  %1610 = vmatprep.subr.mxu0 0.0
  %1611 = vmatpush1.msra.mxu0 0.0
  %1612 = vmatprep.subr.mxu0 0.0
  %1613 = vmatpush1.msra.mxu0 0.0
  %1614 = vmatprep.subr.mxu0 0.0
  %1615 = vmatpush1.msra.mxu0 0.0
  %1616 = vmatprep.mubr.f32.mxu0 0.0
  %v1617 = vand.u32 %v1175, 4294901760
  %1618 = vmatmul.mubr.f32.gmra.mrb[0].mxu0 %v1617
  %v1619 = vpop.f32.mrb[0].mxu0
  %v1620 = vadd.f32 %v1548, %v1619
  %v1621 = vpop.f32.mrb[0].mxu0
  %1622 = vdwg.mxu0
  %v1623 = vmax.f32 %v1620, 0.0
  %v1624 = vld [vmem:[%s7] sm:$0xff]
  %v1625 = vld [vmem:[%s7 + $0x8] sm:$0xff]
  %v1626 = vld [vmem:[%s7 + $0x10] sm:$0xff]
  %v1627 = vld [vmem:[%s7 + $0x18] sm:$0xff]
  %v1628 = vld [vmem:[%s8] sm:$0x1]
  %v1630 = vlaneseq
  %v1631 = vshrl.u32 %v1630, 7
  %v1632 = vsub.s32 0, %v1631
  %v1633 = vrot.slane %v1628, %v1632
  %v1636 = vsel %vm675, %v1623, 0
  %1638 = vmatprep.subr.mxu0 0.0
  %v1639 = vand.u32 %v1624, 4294901760
  %1640 = vmatpush1.msra.mxu0 %v1639
  %1641 = vmatprep.subr.mxu0 0.0
  %v1642 = vand.u32 %v1625, 4294901760
  %1643 = vmatpush1.msra.mxu0 %v1642
  %1644 = vmatprep.subr.mxu0 0.0
  %v1645 = vand.u32 %v1626, 4294901760
  %1646 = vmatpush1.msra.mxu0 %v1645
  %1647 = vmatprep.subr.mxu0 0.0
  %v1648 = vand.u32 %v1627, 4294901760
  %1649 = vmatpush1.msra.mxu0 %v1648
  %1650 = vmatprep.subr.mxu0 0.0
  %1651 = vmatpush1.msra.mxu0 0.0
  %1652 = vmatprep.subr.mxu0 0.0
  %1653 = vmatpush1.msra.mxu0 0.0
  %1654 = vmatprep.subr.mxu0 0.0
  %1655 = vmatpush1.msra.mxu0 0.0
  %1656 = vmatprep.subr.mxu0 0.0
  %1657 = vmatpush1.msra.mxu0 0.0
  %1658 = vmatprep.subr.mxu0 0.0
  %1659 = vmatpush1.msra.mxu0 0.0
  %1660 = vmatprep.subr.mxu0 0.0
  %1661 = vmatpush1.msra.mxu0 0.0
  %1662 = vmatprep.subr.mxu0 0.0
  %1663 = vmatpush1.msra.mxu0 0.0
  %1664 = vmatprep.subr.mxu0 0.0
  %1665 = vmatpush1.msra.mxu0 0.0
  %1666 = vmatprep.subr.mxu0 0.0
  %1667 = vmatpush1.msra.mxu0 0.0
  %1668 = vmatprep.subr.mxu0 0.0
  %1669 = vmatpush1.msra.mxu0 0.0
  %1670 = vmatprep.subr.mxu0 0.0
  %1671 = vmatpush1.msra.mxu0 0.0
  %1672 = vmatprep.subr.mxu0 0.0
  %1673 = vmatpush1.msra.mxu0 0.0
  %1674 = vmatprep.subr.mxu0 0.0
  %1675 = vmatpush1.msra.mxu0 0.0
  %1676 = vmatprep.subr.mxu0 0.0
  %1677 = vmatpush1.msra.mxu0 0.0
  %1678 = vmatprep.subr.mxu0 0.0
  %1679 = vmatpush1.msra.mxu0 0.0
  %1680 = vmatprep.subr.mxu0 0.0
  %1681 = vmatpush1.msra.mxu0 0.0
  %1682 = vmatprep.subr.mxu0 0.0
  %1683 = vmatpush1.msra.mxu0 0.0
  %1684 = vmatprep.subr.mxu0 0.0
  %1685 = vmatpush1.msra.mxu0 0.0
  %1686 = vmatprep.subr.mxu0 0.0
  %1687 = vmatpush1.msra.mxu0 0.0
  %1688 = vmatprep.subr.mxu0 0.0
  %1689 = vmatpush1.msra.mxu0 0.0
  %1690 = vmatprep.subr.mxu0 0.0
  %1691 = vmatpush1.msra.mxu0 0.0
  %1692 = vmatprep.subr.mxu0 0.0
  %1693 = vmatpush1.msra.mxu0 0.0
  %1694 = vmatprep.subr.mxu0 0.0
  %1695 = vmatpush1.msra.mxu0 0.0
  %1696 = vmatprep.subr.mxu0 0.0
  %1697 = vmatpush1.msra.mxu0 0.0
  %1698 = vmatprep.subr.mxu0 0.0
  %1699 = vmatpush1.msra.mxu0 0.0
  %1700 = vmatprep.subr.mxu0 0.0
  %1701 = vmatpush1.msra.mxu0 0.0
  %1702 = vmatprep.subr.mxu0 0.0
  %1703 = vmatpush1.msra.mxu0 0.0
  %1704 = vmatprep.subr.mxu0 0.0
  %1705 = vmatpush1.msra.mxu0 0.0
  %1706 = vmatprep.mubr.f32.mxu0 0.0
  %v1707 = vand.u32 %v1636, 4294901760
  %v1708 = vsub.f32 %v1636, %v1707
  %v1709 = vand.u32 %v1708, 4294901760
  %v1710 = vsub.f32 %v1708, %v1709
  %v1711 = vand.u32 %v1710, 4294901760
  %1712 = vmatmul.mubr.f32.gmra.mrb[0].mxu0 %v1711
  %v1713 = vpop.f32.mrb[0].mxu0
  %v1714 = vadd.f32 %v1633, %v1713
  %v1715 = vpop.f32.mrb[0].mxu0
  %1716 = vdwg.mxu0
  %1717 = vmatprep.subr.mxu0 0.0
  %v1718 = vand.u32 %v1624, 4294901760
  %v1719 = vsub.f32 %v1624, %v1718
  %v1720 = vand.u32 %v1719, 4294901760
  %v1721 = vsub.f32 %v1719, %v1720
  %v1722 = vand.u32 %v1721, 4294901760
  %1723 = vmatpush1.msra.mxu0 %v1722
  %1724 = vmatprep.subr.mxu0 0.0
  %v1725 = vand.u32 %v1625, 4294901760
  %v1726 = vsub.f32 %v1625, %v1725
  %v1727 = vand.u32 %v1726, 4294901760
  %v1728 = vsub.f32 %v1726, %v1727
  %v1729 = vand.u32 %v1728, 4294901760
  %1730 = vmatpush1.msra.mxu0 %v1729
  %1731 = vmatprep.subr.mxu0 0.0
  %v1732 = vand.u32 %v1626, 4294901760
  %v1733 = vsub.f32 %v1626, %v1732
  %v1734 = vand.u32 %v1733, 4294901760
  %v1735 = vsub.f32 %v1733, %v1734
  %v1736 = vand.u32 %v1735, 4294901760
  %1737 = vmatpush1.msra.mxu0 %v1736
  %1738 = vmatprep.subr.mxu0 0.0
  %v1739 = vand.u32 %v1627, 4294901760
  %v1740 = vsub.f32 %v1627, %v1739
  %v1741 = vand.u32 %v1740, 4294901760
  %v1742 = vsub.f32 %v1740, %v1741
  %v1743 = vand.u32 %v1742, 4294901760
  %1744 = vmatpush1.msra.mxu0 %v1743
  %1745 = vmatprep.subr.mxu0 0.0
  %1746 = vmatpush1.msra.mxu0 0.0
  %1747 = vmatprep.subr.mxu0 0.0
  %1748 = vmatpush1.msra.mxu0 0.0
  %1749 = vmatprep.subr.mxu0 0.0
  %1750 = vmatpush1.msra.mxu0 0.0
  %1751 = vmatprep.subr.mxu0 0.0
  %1752 = vmatpush1.msra.mxu0 0.0
  %1753 = vmatprep.subr.mxu0 0.0
  %1754 = vmatpush1.msra.mxu0 0.0
  %1755 = vmatprep.subr.mxu0 0.0
  %1756 = vmatpush1.msra.mxu0 0.0
  %1757 = vmatprep.subr.mxu0 0.0
  %1758 = vmatpush1.msra.mxu0 0.0
  %1759 = vmatprep.subr.mxu0 0.0
  %1760 = vmatpush1.msra.mxu0 0.0
  %1761 = vmatprep.subr.mxu0 0.0
  %1762 = vmatpush1.msra.mxu0 0.0
  %1763 = vmatprep.subr.mxu0 0.0
  %1764 = vmatpush1.msra.mxu0 0.0
  %1765 = vmatprep.subr.mxu0 0.0
  %1766 = vmatpush1.msra.mxu0 0.0
  %1767 = vmatprep.subr.mxu0 0.0
  %1768 = vmatpush1.msra.mxu0 0.0
  %1769 = vmatprep.subr.mxu0 0.0
  %1770 = vmatpush1.msra.mxu0 0.0
  %1771 = vmatprep.subr.mxu0 0.0
  %1772 = vmatpush1.msra.mxu0 0.0
  %1773 = vmatprep.subr.mxu0 0.0
  %1774 = vmatpush1.msra.mxu0 0.0
  %1775 = vmatprep.subr.mxu0 0.0
  %1776 = vmatpush1.msra.mxu0 0.0
  %1777 = vmatprep.subr.mxu0 0.0
  %1778 = vmatpush1.msra.mxu0 0.0
  %1779 = vmatprep.subr.mxu0 0.0
  %1780 = vmatpush1.msra.mxu0 0.0
  %1781 = vmatprep.subr.mxu0 0.0
  %1782 = vmatpush1.msra.mxu0 0.0
  %1783 = vmatprep.subr.mxu0 0.0
  %1784 = vmatpush1.msra.mxu0 0.0
  %1785 = vmatprep.subr.mxu0 0.0
  %1786 = vmatpush1.msra.mxu0 0.0
  %1787 = vmatprep.subr.mxu0 0.0
  %1788 = vmatpush1.msra.mxu0 0.0
  %1789 = vmatprep.subr.mxu0 0.0
  %1790 = vmatpush1.msra.mxu0 0.0
  %1791 = vmatprep.subr.mxu0 0.0
  %1792 = vmatpush1.msra.mxu0 0.0
  %1793 = vmatprep.subr.mxu0 0.0
  %1794 = vmatpush1.msra.mxu0 0.0
  %1795 = vmatprep.subr.mxu0 0.0
  %1796 = vmatpush1.msra.mxu0 0.0
  %1797 = vmatprep.subr.mxu0 0.0
  %1798 = vmatpush1.msra.mxu0 0.0
  %1799 = vmatprep.subr.mxu0 0.0
  %1800 = vmatpush1.msra.mxu0 0.0
  %1801 = vmatprep.mubr.f32.mxu0 0.0
  %v1802 = vand.u32 %v1636, 4294901760
  %1803 = vmatmul.mubr.f32.gmra.mrb[0].mxu0 %v1802
  %v1804 = vpop.f32.mrb[0].mxu0
  %v1805 = vadd.f32 %v1714, %v1804
  %v1806 = vpop.f32.mrb[0].mxu0
  %1807 = vdwg.mxu0
  %1808 = vmatprep.subr.mxu0 0.0
  %v1809 = vand.u32 %v1624, 4294901760
  %v1810 = vsub.f32 %v1624, %v1809
  %1811 = vmatpush1.msra.mxu0 %v1810
  %1812 = vmatprep.subr.mxu0 0.0
  %v1813 = vand.u32 %v1625, 4294901760
  %v1814 = vsub.f32 %v1625, %v1813
  %1815 = vmatpush1.msra.mxu0 %v1814
  %1816 = vmatprep.subr.mxu0 0.0
  %v1817 = vand.u32 %v1626, 4294901760
  %v1818 = vsub.f32 %v1626, %v1817
  %1819 = vmatpush1.msra.mxu0 %v1818
  %1820 = vmatprep.subr.mxu0 0.0
  %v1821 = vand.u32 %v1627, 4294901760
  %v1822 = vsub.f32 %v1627, %v1821
  %1823 = vmatpush1.msra.mxu0 %v1822
  %1824 = vmatprep.subr.mxu0 0.0
  %1825 = vmatpush1.msra.mxu0 0.0
  %1826 = vmatprep.subr.mxu0 0.0
  %1827 = vmatpush1.msra.mxu0 0.0
  %1828 = vmatprep.subr.mxu0 0.0
  %1829 = vmatpush1.msra.mxu0 0.0
  %1830 = vmatprep.subr.mxu0 0.0
  %1831 = vmatpush1.msra.mxu0 0.0
  %1832 = vmatprep.subr.mxu0 0.0
  %1833 = vmatpush1.msra.mxu0 0.0
  %1834 = vmatprep.subr.mxu0 0.0
  %1835 = vmatpush1.msra.mxu0 0.0
  %1836 = vmatprep.subr.mxu0 0.0
  %1837 = vmatpush1.msra.mxu0 0.0
  %1838 = vmatprep.subr.mxu0 0.0
  %1839 = vmatpush1.msra.mxu0 0.0
  %1840 = vmatprep.subr.mxu0 0.0
  %1841 = vmatpush1.msra.mxu0 0.0
  %1842 = vmatprep.subr.mxu0 0.0
  %1843 = vmatpush1.msra.mxu0 0.0
  %1844 = vmatprep.subr.mxu0 0.0
  %1845 = vmatpush1.msra.mxu0 0.0
  %1846 = vmatprep.subr.mxu0 0.0
  %1847 = vmatpush1.msra.mxu0 0.0
  %1848 = vmatprep.subr.mxu0 0.0
  %1849 = vmatpush1.msra.mxu0 0.0
  %1850 = vmatprep.subr.mxu0 0.0
  %1851 = vmatpush1.msra.mxu0 0.0
  %1852 = vmatprep.subr.mxu0 0.0
  %1853 = vmatpush1.msra.mxu0 0.0
  %1854 = vmatprep.subr.mxu0 0.0
  %1855 = vmatpush1.msra.mxu0 0.0
  %1856 = vmatprep.subr.mxu0 0.0
  %1857 = vmatpush1.msra.mxu0 0.0
  %1858 = vmatprep.subr.mxu0 0.0
  %1859 = vmatpush1.msra.mxu0 0.0
  %1860 = vmatprep.subr.mxu0 0.0
  %1861 = vmatpush1.msra.mxu0 0.0
  %1862 = vmatprep.subr.mxu0 0.0
  %1863 = vmatpush1.msra.mxu0 0.0
  %1864 = vmatprep.subr.mxu0 0.0
  %1865 = vmatpush1.msra.mxu0 0.0
  %1866 = vmatprep.subr.mxu0 0.0
  %1867 = vmatpush1.msra.mxu0 0.0
  %1868 = vmatprep.subr.mxu0 0.0
  %1869 = vmatpush1.msra.mxu0 0.0
  %1870 = vmatprep.subr.mxu0 0.0
  %1871 = vmatpush1.msra.mxu0 0.0
  %1872 = vmatprep.subr.mxu0 0.0
  %1873 = vmatpush1.msra.mxu0 0.0
  %1874 = vmatprep.subr.mxu0 0.0
  %1875 = vmatpush1.msra.mxu0 0.0
  %1876 = vmatprep.subr.mxu0 0.0
  %1877 = vmatpush1.msra.mxu0 0.0
  %1878 = vmatprep.subr.mxu0 0.0
  %1879 = vmatpush1.msra.mxu0 0.0
  %1880 = vmatprep.mubr.f32.mxu0 0.0
  %v1881 = vand.u32 %v1636, 4294901760
  %v1882 = vsub.f32 %v1636, %v1881
  %1883 = vmatmul.mubr.f32.gmra.mrb[0].mxu0 %v1882
  %v1884 = vpop.f32.mrb[0].mxu0
  %v1885 = vadd.f32 %v1805, %v1884
  %v1886 = vpop.f32.mrb[0].mxu0
  %1887 = vdwg.mxu0
  %1888 = vmatprep.subr.mxu0 0.0
  %v1889 = vand.u32 %v1624, 4294901760
  %1890 = vmatpush1.msra.mxu0 %v1889
  %1891 = vmatprep.subr.mxu0 0.0
  %v1892 = vand.u32 %v1625, 4294901760
  %1893 = vmatpush1.msra.mxu0 %v1892
  %1894 = vmatprep.subr.mxu0 0.0
  %v1895 = vand.u32 %v1626, 4294901760
  %1896 = vmatpush1.msra.mxu0 %v1895
  %1897 = vmatprep.subr.mxu0 0.0
  %v1898 = vand.u32 %v1627, 4294901760
  %1899 = vmatpush1.msra.mxu0 %v1898
  %1900 = vmatprep.subr.mxu0 0.0
  %1901 = vmatpush1.msra.mxu0 0.0
  %1902 = vmatprep.subr.mxu0 0.0
  %1903 = vmatpush1.msra.mxu0 0.0
  %1904 = vmatprep.subr.mxu0 0.0
  %1905 = vmatpush1.msra.mxu0 0.0
  %1906 = vmatprep.subr.mxu0 0.0
  %1907 = vmatpush1.msra.mxu0 0.0
  %1908 = vmatprep.subr.mxu0 0.0
  %1909 = vmatpush1.msra.mxu0 0.0
  %1910 = vmatprep.subr.mxu0 0.0
  %1911 = vmatpush1.msra.mxu0 0.0
  %1912 = vmatprep.subr.mxu0 0.0
  %1913 = vmatpush1.msra.mxu0 0.0
  %1914 = vmatprep.subr.mxu0 0.0
  %1915 = vmatpush1.msra.mxu0 0.0
  %1916 = vmatprep.subr.mxu0 0.0
  %1917 = vmatpush1.msra.mxu0 0.0
  %1918 = vmatprep.subr.mxu0 0.0
  %1919 = vmatpush1.msra.mxu0 0.0
  %1920 = vmatprep.subr.mxu0 0.0
  %1921 = vmatpush1.msra.mxu0 0.0
  %1922 = vmatprep.subr.mxu0 0.0
  %1923 = vmatpush1.msra.mxu0 0.0
  %1924 = vmatprep.subr.mxu0 0.0
  %1925 = vmatpush1.msra.mxu0 0.0
  %1926 = vmatprep.subr.mxu0 0.0
  %1927 = vmatpush1.msra.mxu0 0.0
  %1928 = vmatprep.subr.mxu0 0.0
  %1929 = vmatpush1.msra.mxu0 0.0
  %1930 = vmatprep.subr.mxu0 0.0
  %1931 = vmatpush1.msra.mxu0 0.0
  %1932 = vmatprep.subr.mxu0 0.0
  %1933 = vmatpush1.msra.mxu0 0.0
  %1934 = vmatprep.subr.mxu0 0.0
  %1935 = vmatpush1.msra.mxu0 0.0
  %1936 = vmatprep.subr.mxu0 0.0
  %1937 = vmatpush1.msra.mxu0 0.0
  %1938 = vmatprep.subr.mxu0 0.0
  %1939 = vmatpush1.msra.mxu0 0.0
  %1940 = vmatprep.subr.mxu0 0.0
  %1941 = vmatpush1.msra.mxu0 0.0
  %1942 = vmatprep.subr.mxu0 0.0
  %1943 = vmatpush1.msra.mxu0 0.0
  %1944 = vmatprep.subr.mxu0 0.0
  %1945 = vmatpush1.msra.mxu0 0.0
  %1946 = vmatprep.subr.mxu0 0.0
  %1947 = vmatpush1.msra.mxu0 0.0
  %1948 = vmatprep.subr.mxu0 0.0
  %1949 = vmatpush1.msra.mxu0 0.0
  %1950 = vmatprep.subr.mxu0 0.0
  %1951 = vmatpush1.msra.mxu0 0.0
  %1952 = vmatprep.subr.mxu0 0.0
  %1953 = vmatpush1.msra.mxu0 0.0
  %1954 = vmatprep.subr.mxu0 0.0
  %1955 = vmatpush1.msra.mxu0 0.0
  %1956 = vmatprep.mubr.f32.mxu0 0.0
  %v1957 = vand.u32 %v1636, 4294901760
  %v1958 = vsub.f32 %v1636, %v1957
  %v1959 = vand.u32 %v1958, 4294901760
  %1960 = vmatmul.mubr.f32.gmra.mrb[0].mxu0 %v1959
  %v1961 = vpop.f32.mrb[0].mxu0
  %v1962 = vadd.f32 %v1885, %v1961
  %v1963 = vpop.f32.mrb[0].mxu0
  %1964 = vdwg.mxu0
  %1965 = vmatprep.subr.mxu0 0.0
  %v1966 = vand.u32 %v1624, 4294901760
  %v1967 = vsub.f32 %v1624, %v1966
  %v1968 = vand.u32 %v1967, 4294901760
  %1969 = vmatpush1.msra.mxu0 %v1968
  %1970 = vmatprep.subr.mxu0 0.0
  %v1971 = vand.u32 %v1625, 4294901760
  %v1972 = vsub.f32 %v1625, %v1971
  %v1973 = vand.u32 %v1972, 4294901760
  %1974 = vmatpush1.msra.mxu0 %v1973
  %1975 = vmatprep.subr.mxu0 0.0
  %v1976 = vand.u32 %v1626, 4294901760
  %v1977 = vsub.f32 %v1626, %v1976
  %v1978 = vand.u32 %v1977, 4294901760
  %1979 = vmatpush1.msra.mxu0 %v1978
  %1980 = vmatprep.subr.mxu0 0.0
  %v1981 = vand.u32 %v1627, 4294901760
  %v1982 = vsub.f32 %v1627, %v1981
  %v1983 = vand.u32 %v1982, 4294901760
  %1984 = vmatpush1.msra.mxu0 %v1983
  %1985 = vmatprep.subr.mxu0 0.0
  %1986 = vmatpush1.msra.mxu0 0.0
  %1987 = vmatprep.subr.mxu0 0.0
  %1988 = vmatpush1.msra.mxu0 0.0
  %1989 = vmatprep.subr.mxu0 0.0
  %1990 = vmatpush1.msra.mxu0 0.0
  %1991 = vmatprep.subr.mxu0 0.0
  %1992 = vmatpush1.msra.mxu0 0.0
  %1993 = vmatprep.subr.mxu0 0.0
  %1994 = vmatpush1.msra.mxu0 0.0
  %1995 = vmatprep.subr.mxu0 0.0
  %1996 = vmatpush1.msra.mxu0 0.0
  %1997 = vmatprep.subr.mxu0 0.0
  %1998 = vmatpush1.msra.mxu0 0.0
  %1999 = vmatprep.subr.mxu0 0.0
  %2000 = vmatpush1.msra.mxu0 0.0
  %2001 = vmatprep.subr.mxu0 0.0
  %2002 = vmatpush1.msra.mxu0 0.0
  %2003 = vmatprep.subr.mxu0 0.0
  %2004 = vmatpush1.msra.mxu0 0.0
  %2005 = vmatprep.subr.mxu0 0.0
  %2006 = vmatpush1.msra.mxu0 0.0
  %2007 = vmatprep.subr.mxu0 0.0
  %2008 = vmatpush1.msra.mxu0 0.0
  %2009 = vmatprep.subr.mxu0 0.0
  %2010 = vmatpush1.msra.mxu0 0.0
  %2011 = vmatprep.subr.mxu0 0.0
  %2012 = vmatpush1.msra.mxu0 0.0
  %2013 = vmatprep.subr.mxu0 0.0
  %2014 = vmatpush1.msra.mxu0 0.0
  %2015 = vmatprep.subr.mxu0 0.0
  %2016 = vmatpush1.msra.mxu0 0.0
  %2017 = vmatprep.subr.mxu0 0.0
  %2018 = vmatpush1.msra.mxu0 0.0
  %2019 = vmatprep.subr.mxu0 0.0
  %2020 = vmatpush1.msra.mxu0 0.0
  %2021 = vmatprep.subr.mxu0 0.0
  %2022 = vmatpush1.msra.mxu0 0.0
  %2023 = vmatprep.subr.mxu0 0.0
  %2024 = vmatpush1.msra.mxu0 0.0
  %2025 = vmatprep.subr.mxu0 0.0
  %2026 = vmatpush1.msra.mxu0 0.0
  %2027 = vmatprep.subr.mxu0 0.0
  %2028 = vmatpush1.msra.mxu0 0.0
  %2029 = vmatprep.subr.mxu0 0.0
  %2030 = vmatpush1.msra.mxu0 0.0
  %2031 = vmatprep.subr.mxu0 0.0
  %2032 = vmatpush1.msra.mxu0 0.0
  %2033 = vmatprep.subr.mxu0 0.0
  %2034 = vmatpush1.msra.mxu0 0.0
  %2035 = vmatprep.subr.mxu0 0.0
  %2036 = vmatpush1.msra.mxu0 0.0
  %2037 = vmatprep.subr.mxu0 0.0
  %2038 = vmatpush1.msra.mxu0 0.0
  %2039 = vmatprep.subr.mxu0 0.0
  %2040 = vmatpush1.msra.mxu0 0.0
  %2041 = vmatprep.mubr.f32.mxu0 0.0
  %v2042 = vand.u32 %v1636, 4294901760
  %2043 = vmatmul.mubr.f32.gmra.mrb[0].mxu0 %v2042
  %v2044 = vpop.f32.mrb[0].mxu0
  %v2045 = vadd.f32 %v1962, %v2044
  %v2046 = vpop.f32.mrb[0].mxu0
  %2047 = vdwg.mxu0
  %2048 = vmatprep.subr.mxu0 0.0
  %v2049 = vand.u32 %v1624, 4294901760
  %2050 = vmatpush1.msra.mxu0 %v2049
  %2051 = vmatprep.subr.mxu0 0.0
  %v2052 = vand.u32 %v1625, 4294901760
  %2053 = vmatpush1.msra.mxu0 %v2052
  %2054 = vmatprep.subr.mxu0 0.0
  %v2055 = vand.u32 %v1626, 4294901760
  %2056 = vmatpush1.msra.mxu0 %v2055
  %2057 = vmatprep.subr.mxu0 0.0
  %v2058 = vand.u32 %v1627, 4294901760
  %2059 = vmatpush1.msra.mxu0 %v2058
  %2060 = vmatprep.subr.mxu0 0.0
  %2061 = vmatpush1.msra.mxu0 0.0
  %2062 = vmatprep.subr.mxu0 0.0
  %2063 = vmatpush1.msra.mxu0 0.0
  %2064 = vmatprep.subr.mxu0 0.0
  %2065 = vmatpush1.msra.mxu0 0.0
  %2066 = vmatprep.subr.mxu0 0.0
  %2067 = vmatpush1.msra.mxu0 0.0
  %2068 = vmatprep.subr.mxu0 0.0
  %2069 = vmatpush1.msra.mxu0 0.0
  %2070 = vmatprep.subr.mxu0 0.0
  %2071 = vmatpush1.msra.mxu0 0.0
  %2072 = vmatprep.subr.mxu0 0.0
  %2073 = vmatpush1.msra.mxu0 0.0
  %2074 = vmatprep.subr.mxu0 0.0
  %2075 = vmatpush1.msra.mxu0 0.0
  %2076 = vmatprep.subr.mxu0 0.0
  %2077 = vmatpush1.msra.mxu0 0.0
  %2078 = vmatprep.subr.mxu0 0.0
  %2079 = vmatpush1.msra.mxu0 0.0
  %2080 = vmatprep.subr.mxu0 0.0
  %2081 = vmatpush1.msra.mxu0 0.0
  %2082 = vmatprep.subr.mxu0 0.0
  %2083 = vmatpush1.msra.mxu0 0.0
  %2084 = vmatprep.subr.mxu0 0.0
  %2085 = vmatpush1.msra.mxu0 0.0
  %2086 = vmatprep.subr.mxu0 0.0
  %2087 = vmatpush1.msra.mxu0 0.0
  %2088 = vmatprep.subr.mxu0 0.0
  %2089 = vmatpush1.msra.mxu0 0.0
  %2090 = vmatprep.subr.mxu0 0.0
  %2091 = vmatpush1.msra.mxu0 0.0
  %2092 = vmatprep.subr.mxu0 0.0
  %2093 = vmatpush1.msra.mxu0 0.0
  %2094 = vmatprep.subr.mxu0 0.0
  %2095 = vmatpush1.msra.mxu0 0.0
  %2096 = vmatprep.subr.mxu0 0.0
  %2097 = vmatpush1.msra.mxu0 0.0
  %2098 = vmatprep.subr.mxu0 0.0
  %2099 = vmatpush1.msra.mxu0 0.0
  %2100 = vmatprep.subr.mxu0 0.0
  %2101 = vmatpush1.msra.mxu0 0.0
  %2102 = vmatprep.subr.mxu0 0.0
  %2103 = vmatpush1.msra.mxu0 0.0
  %2104 = vmatprep.subr.mxu0 0.0
  %2105 = vmatpush1.msra.mxu0 0.0
  %2106 = vmatprep.subr.mxu0 0.0
  %2107 = vmatpush1.msra.mxu0 0.0
  %2108 = vmatprep.subr.mxu0 0.0
  %2109 = vmatpush1.msra.mxu0 0.0
  %2110 = vmatprep.subr.mxu0 0.0
  %2111 = vmatpush1.msra.mxu0 0.0
  %2112 = vmatprep.subr.mxu0 0.0
  %2113 = vmatpush1.msra.mxu0 0.0
  %2114 = vmatprep.subr.mxu0 0.0
  %2115 = vmatpush1.msra.mxu0 0.0
  %2116 = vmatprep.mubr.f32.mxu0 0.0
  %v2117 = vand.u32 %v1636, 4294901760
  %2118 = vmatmul.mubr.f32.gmra.mrb[0].mxu0 %v2117
  %v2119 = vpop.f32.mrb[0].mxu0
  %v2120 = vadd.f32 %v2045, %v2119
  %v2121 = vpop.f32.mrb[0].mxu0
  %2122 = vdwg.mxu0
  %vm2123 = vcmask 812032
  %2124 = vst.msk [vmem:[%s9] sm:$0x3] %vm2123, %v2120
  // Predicated region
  $region38: #{band_generator_forward.1} parent=0 // pred_check
    _
  $region39: #{band_generator_forward.1} parent=0 // pred_check_branch
    %2126 = sbr.rel (0) target = $region41
  $region40: #{band_generator_forward.1} parent=0 // pred_region
    _
  $region41: #{band_generator_forward.1} parent=0 // pred_fallthru
    _
  // Predicated region
  $region42: #{band_generator_forward.1} parent=0 // pred_check
    _
  $region43: #{band_generator_forward.1} parent=0 // pred_check_branch
    %2128 = sbr.rel (0) target = $region45
  $region44: #{band_generator_forward.1} parent=0 // pred_region
    _
  $region45: #{band_generator_forward.1} parent=0 // pred_fallthru
    _

</llo_original>
